<compile_context>
chip_gen: v7x
topology: tpu7x:2x2x1
jax: 0.10.0
libtpu: 0.0.40
codegen_flags: <defaults>
</compile_context>

<pallas_src>
import functools

import jax
import jax.numpy as jnp
from jax.experimental import pallas as pl
from jax.experimental.pallas import tpu as pltpu


def _window_attention_kernel(x_ref, wq_ref, wk_ref, wv_ref,
                             bq_ref, bk_ref, bv_ref,
                             wp_ref, bp_ref, o_ref, *, compute_dtype):
    """One grid step: `block_b` windows, all heads, fused output projection."""
    blk_b, n, c = x_ref.shape
    num_heads, _, dh = wq_ref.shape
    m = blk_b * n

    # (block_b, N, C) -> (M, C); cast MXU operand once.
    x2d = x_ref[...].reshape(m, c).astype(compute_dtype)

    acc = jnp.zeros((m, c), jnp.float32)
    for h in range(num_heads):                       # static unroll, H is small
        # Per-head projections: (M, C) @ (C, dh), f32 accumulation on the MXU.
        # wq/bq already include the 1/sqrt(dh) scale.
        q = jnp.dot(x2d, wq_ref[h], preferred_element_type=jnp.float32) + bq_ref[h]
        k = jnp.dot(x2d, wk_ref[h], preferred_element_type=jnp.float32) + bk_ref[h]
        v = jnp.dot(x2d, wv_ref[h], preferred_element_type=jnp.float32) + bv_ref[h]

        q3 = q.reshape(blk_b, n, dh).astype(compute_dtype)
        k3 = k.reshape(blk_b, n, dh).astype(compute_dtype)
        v3 = v.reshape(blk_b, n, dh).astype(compute_dtype)

        # Scores: batched over windows, contracting dh — no explicit k transpose.
        s = jax.lax.dot_general(
            q3, k3, dimension_numbers=(((2,), (2,)), ((0,), (0,))),
            preferred_element_type=jnp.float32)      # (block_b, N, N)

        # Numerically stable softmax in f32; normalisation deferred past p @ v.
        s = s - jnp.max(s, axis=-1, keepdims=True)
        p = jnp.exp(s)
        inv = pl.reciprocal(jnp.sum(p, axis=-1, keepdims=True), approx=True)  # EUP

        o_h = jax.lax.dot_general(
            p.astype(compute_dtype), v3,
            dimension_numbers=(((2,), (1,)), ((0,), (0,))),
            preferred_element_type=jnp.float32)      # (block_b, N, dh)
        o_h = (o_h * inv).reshape(m, dh)

        # Fused output projection: accumulate this head's contribution
        # (no per-head concat, no lane-misaligned relayouts).
        acc = acc + jnp.dot(o_h.astype(compute_dtype), wp_ref[h],
                            preferred_element_type=jnp.float32)

    out = acc + bp_ref[...]                          # (M, C) + (1, C)
    o_ref[...] = out.reshape(blk_b, n, c).astype(o_ref.dtype)
    # TODO(synk): the PyTorch module also stashes the attention map in self.attn_map
    # (a host-side side effect, not part of the functional output); not emitted here.


def _pack_params(wqkv, bqkv, wproj, bproj, num_heads, scale, compute_dtype):
    """Re-pack nn.Linear params into per-head slabs; fold the q scale; cast MXU operands."""
    c = wqkv.shape[0]
    dh = c // num_heads
    # qkv output columns are ordered [q | k | v], each split per-head in dh-wide blocks
    # (matches PyTorch reshape(B, N, 3, H, dh)).
    w = wqkv.reshape(c, 3, num_heads, dh)
    wq = jnp.transpose(w[:, 0], (1, 0, 2)) * scale   # (H, C, dh), scale folded into q
    wk = jnp.transpose(w[:, 1], (1, 0, 2))
    wv = jnp.transpose(w[:, 2], (1, 0, 2))
    b = bqkv.reshape(3, num_heads, 1, dh)
    bq = b[0].astype(jnp.float32) * scale            # biases stay f32 (added post-MXU)
    bk = b[1].astype(jnp.float32)
    bv = b[2].astype(jnp.float32)
    wp = wproj.reshape(num_heads, dh, c)             # (H, dh, C): per-head row slabs
    bp = bproj.reshape(1, c).astype(jnp.float32)
    return (wq.astype(compute_dtype), wk.astype(compute_dtype),
            wv.astype(compute_dtype), bq, bk, bv,
            wp.astype(compute_dtype), bp)


def _pick_block_b(num_windows):
    """Largest divisor of B keeping >= 2 grid steps (megacore) and <= 16 windows/step."""
    cap = min(16, max(1, num_windows // 2))
    for cand in range(cap, 0, -1):
        if num_windows % cand == 0:
            return cand
    return 1


def window_attention(x, wqkv, bqkv, wproj, bproj, *, num_heads,
                     block_b=None, compute_dtype=jnp.bfloat16):
    B, N, C = x.shape
    assert C % num_heads == 0
    dh = C // num_heads
    scale = float(dh ** -0.5)
    if block_b is None:
        block_b = _pick_block_b(B)
    assert B % block_b == 0, "block_b must divide the number of windows"

    wq, wk, wv, bq, bk, bv, wp, bp = _pack_params(
        wqkv, bqkv, wproj, bproj, num_heads, scale, compute_dtype)

    kernel = functools.partial(_window_attention_kernel, compute_dtype=compute_dtype)
    const3 = lambda b: (0, 0, 0)   # grid-invariant params: stay resident across steps

    return pl.pallas_call(
        kernel,
        out_shape=jax.ShapeDtypeStruct((B, N, C), x.dtype),
        grid=(B // block_b,),
        in_specs=[
            pl.BlockSpec((block_b, N, C), lambda b: (b, 0, 0)),   # x: block_b windows/step
            pl.BlockSpec((num_heads, C, dh), const3),             # wq (scale folded in)
            pl.BlockSpec((num_heads, C, dh), const3),             # wk
            pl.BlockSpec((num_heads, C, dh), const3),             # wv
            pl.BlockSpec((num_heads, 1, dh), const3),             # bq (f32)
            pl.BlockSpec((num_heads, 1, dh), const3),             # bk (f32)
            pl.BlockSpec((num_heads, 1, dh), const3),             # bv (f32)
            pl.BlockSpec((num_heads, dh, C), const3),             # wproj per-head row slabs
            pl.BlockSpec((1, C), lambda b: (0, 0)),               # bproj (f32)
        ],
        out_specs=pl.BlockSpec((block_b, N, C), lambda b: (b, 0, 0)),
        compiler_params=pltpu.CompilerParams(
            dimension_semantics=("parallel",),        # window axis -> both TCs on v7x
            vmem_limit_bytes=64 * 1024 * 1024,        # explicit budget, fits v7x 64 MiB
        ),
    )(x, wq, wk, wv, bq, bk, bv, wp, bp)


def reference_window_attention(x, wqkv, bqkv, wproj, bproj, *, num_heads):
    """Pure-JAX reference matching the PyTorch forward semantics (f32)."""
    B, N, C = x.shape
    dh = C // num_heads
    scale = dh ** -0.5
    qkv = x @ wqkv + bqkv                                         # (B, N, 3C)
    qkv = qkv.reshape(B, N, 3, num_heads, dh).transpose(2, 0, 3, 1, 4)
    q, k, v = qkv[0], qkv[1], qkv[2]                              # (B, H, N, dh)
    attn = jnp.einsum('bhnd,bhmd->bhnm', q, k) * scale
    attn = jax.nn.softmax(attn, axis=-1)
    out = jnp.einsum('bhnm,bhmd->bhnd', attn, v)
    out = out.transpose(0, 2, 1, 3).reshape(B, N, C)
    return out @ wproj + bproj


if __name__ == "__main__":
    B, N, C = 2, 8, 32
    num_heads = 4

    key = jax.random.PRNGKey(0)
    kx, k1, k2, k3, k4 = jax.random.split(key, 5)

    # Deterministic parameter init (PyTorch Linear default: U(-1/sqrt(fan_in), +)).
    bound = 1.0 / (C ** 0.5)
    wqkv = jax.random.uniform(k1, (C, 3 * C), jnp.float32, -bound, bound)
    bqkv = jax.random.uniform(k2, (3 * C,), jnp.float32, -bound, bound)
    wproj = jax.random.uniform(k3, (C, C), jnp.float32, -bound, bound)
    bproj = jax.random.uniform(k4, (C,), jnp.float32, -bound, bound)
    x = jax.random.normal(kx, (B, N, C), jnp.float32)

    ref = reference_window_attention(x, wqkv, bqkv, wproj, bproj, num_heads=num_heads)

    # Default (fast) path: bf16 MXU operands, f32 accumulation & softmax.
    out_bf16 = jax.block_until_ready(
        window_attention(x, wqkv, bqkv, wproj, bproj, num_heads=num_heads))
    assert out_bf16.shape == (B, N, C)
    assert jnp.allclose(out_bf16, ref, atol=5e-2, rtol=5e-2), "bf16 path mismatch vs reference"

    # Full-precision path: tight structural check of the kernel.
    out_f32 = jax.block_until_ready(
        window_attention(x, wqkv, bqkv, wproj, bproj, num_heads=num_heads,
                         compute_dtype=jnp.float32))
    assert jnp.allclose(out_f32, ref, atol=5e-3, rtol=5e-3), "f32 path mismatch vs reference"

    print("KERNEL_OK")
</pallas_src>

<mosaic_0001>
module attributes {stable_mosaic.version = 11 : i64} {
  func.func @_window_attention_kernel(%arg0: i32, %arg1: memref<1x8x32xf32, #tpu.memory_space<vmem>>, %arg2: memref<4x32x8xbf16, #tpu.memory_space<vmem>>, %arg3: memref<4x32x8xbf16, #tpu.memory_space<vmem>>, %arg4: memref<4x32x8xbf16, #tpu.memory_space<vmem>>, %arg5: memref<4x1x8xf32, #tpu.memory_space<vmem>>, %arg6: memref<4x1x8xf32, #tpu.memory_space<vmem>>, %arg7: memref<4x1x8xf32, #tpu.memory_space<vmem>>, %arg8: memref<4x8x32xbf16, #tpu.memory_space<vmem>>, %arg9: memref<1x32xf32, #tpu.memory_space<vmem>>, %arg10: memref<1x8x32xf32, #tpu.memory_space<vmem>>) attributes {dimension_semantics = [#tpu.dimension_semantics<parallel>], iteration_bounds = array<i64: 2>, scalar_prefetch = 0 : i64, scratch_operands = 0 : i64, tpu.core_type = #tpu.core_type<tc>, window_params = [{transform_indices = @transform_0, window_bounds = array<i64: 1, 8, 32>}, {pipeline_mode = #tpu.pipeline_mode<synchronous>, transform_indices = @transform_1, window_bounds = array<i64: 4, 32, 8>}, {pipeline_mode = #tpu.pipeline_mode<synchronous>, transform_indices = @transform_2, window_bounds = array<i64: 4, 32, 8>}, {pipeline_mode = #tpu.pipeline_mode<synchronous>, transform_indices = @transform_3, window_bounds = array<i64: 4, 32, 8>}, {pipeline_mode = #tpu.pipeline_mode<synchronous>, transform_indices = @transform_4, window_bounds = array<i64: 4, 1, 8>}, {pipeline_mode = #tpu.pipeline_mode<synchronous>, transform_indices = @transform_5, window_bounds = array<i64: 4, 1, 8>}, {pipeline_mode = #tpu.pipeline_mode<synchronous>, transform_indices = @transform_6, window_bounds = array<i64: 4, 1, 8>}, {pipeline_mode = #tpu.pipeline_mode<synchronous>, transform_indices = @transform_7, window_bounds = array<i64: 4, 8, 32>}, {pipeline_mode = #tpu.pipeline_mode<synchronous>, transform_indices = @transform_8, window_bounds = array<i64: 1, 32>}, {transform_indices = @transform_9, window_bounds = array<i64: 1, 8, 32>}]} {
    %c0 = arith.constant 0 : index
    %c0_0 = arith.constant 0 : index
    %c0_1 = arith.constant 0 : index
    %0 = vector.load %arg1[%c0, %c0_0, %c0_1] : memref<1x8x32xf32, #tpu.memory_space<vmem>>, vector<1x8x32xf32>
    %1 = vector.shape_cast %0 : vector<1x8x32xf32> to vector<8x32xf32>
    %2 = arith.truncf %1 : vector<8x32xf32> to vector<8x32xbf16>
    %cst = arith.constant 0.000000e+00 : f32
    %3 = vector.broadcast %cst : f32 to vector<8x32xf32>
    %c0_2 = arith.constant 0 : index
    %c0_3 = arith.constant 0 : index
    %c0_4 = arith.constant 0 : index
    %4 = vector.load %arg2[%c0_2, %c0_3, %c0_4] : memref<4x32x8xbf16, #tpu.memory_space<vmem>>, vector<1x32x8xbf16>
    %5 = vector.shape_cast %4 : vector<1x32x8xbf16> to vector<32x8xbf16>
    %cst_5 = arith.constant dense<0.000000e+00> : vector<8x8xf32>
    %6 = tpu.matmul %2, %5, %cst_5 {dimension_numbers = #tpu.dot_dimension_numbers<[1], [0], [0], [1], [0, 0, 1, 1], [], []>} : vector<8x32xbf16>, vector<32x8xbf16>, vector<8x8xf32> -> vector<8x8xf32>
    %c0_6 = arith.constant 0 : index
    %c0_7 = arith.constant 0 : index
    %c0_8 = arith.constant 0 : index
    %7 = vector.load %arg5[%c0_6, %c0_7, %c0_8] : memref<4x1x8xf32, #tpu.memory_space<vmem>>, vector<1x1x8xf32>
    %8 = vector.shape_cast %7 : vector<1x1x8xf32> to vector<1x8xf32>
    %9 = vector.broadcast %8 : vector<1x8xf32> to vector<8x8xf32>
    %10 = arith.addf %6, %9 : vector<8x8xf32>
    %c0_9 = arith.constant 0 : index
    %c0_10 = arith.constant 0 : index
    %c0_11 = arith.constant 0 : index
    %11 = vector.load %arg3[%c0_9, %c0_10, %c0_11] : memref<4x32x8xbf16, #tpu.memory_space<vmem>>, vector<1x32x8xbf16>
    %12 = vector.shape_cast %11 : vector<1x32x8xbf16> to vector<32x8xbf16>
    %cst_12 = arith.constant dense<0.000000e+00> : vector<8x8xf32>
    %13 = tpu.matmul %2, %12, %cst_12 {dimension_numbers = #tpu.dot_dimension_numbers<[1], [0], [0], [1], [0, 0, 1, 1], [], []>} : vector<8x32xbf16>, vector<32x8xbf16>, vector<8x8xf32> -> vector<8x8xf32>
    %c0_13 = arith.constant 0 : index
    %c0_14 = arith.constant 0 : index
    %c0_15 = arith.constant 0 : index
    %14 = vector.load %arg6[%c0_13, %c0_14, %c0_15] : memref<4x1x8xf32, #tpu.memory_space<vmem>>, vector<1x1x8xf32>
    %15 = vector.shape_cast %14 : vector<1x1x8xf32> to vector<1x8xf32>
    %16 = vector.broadcast %15 : vector<1x8xf32> to vector<8x8xf32>
    %17 = arith.addf %13, %16 : vector<8x8xf32>
    %c0_16 = arith.constant 0 : index
    %c0_17 = arith.constant 0 : index
    %c0_18 = arith.constant 0 : index
    %18 = vector.load %arg4[%c0_16, %c0_17, %c0_18] : memref<4x32x8xbf16, #tpu.memory_space<vmem>>, vector<1x32x8xbf16>
    %19 = vector.shape_cast %18 : vector<1x32x8xbf16> to vector<32x8xbf16>
    %cst_19 = arith.constant dense<0.000000e+00> : vector<8x8xf32>
    %20 = tpu.matmul %2, %19, %cst_19 {dimension_numbers = #tpu.dot_dimension_numbers<[1], [0], [0], [1], [0, 0, 1, 1], [], []>} : vector<8x32xbf16>, vector<32x8xbf16>, vector<8x8xf32> -> vector<8x8xf32>
    %c0_20 = arith.constant 0 : index
    %c0_21 = arith.constant 0 : index
    %c0_22 = arith.constant 0 : index
    %21 = vector.load %arg7[%c0_20, %c0_21, %c0_22] : memref<4x1x8xf32, #tpu.memory_space<vmem>>, vector<1x1x8xf32>
    %22 = vector.shape_cast %21 : vector<1x1x8xf32> to vector<1x8xf32>
    %23 = vector.broadcast %22 : vector<1x8xf32> to vector<8x8xf32>
    %24 = arith.addf %20, %23 : vector<8x8xf32>
    %25 = vector.shape_cast %10 : vector<8x8xf32> to vector<1x8x8xf32>
    %26 = arith.truncf %25 : vector<1x8x8xf32> to vector<1x8x8xbf16>
    %27 = vector.shape_cast %17 : vector<8x8xf32> to vector<1x8x8xf32>
    %28 = arith.truncf %27 : vector<1x8x8xf32> to vector<1x8x8xbf16>
    %29 = vector.shape_cast %24 : vector<8x8xf32> to vector<1x8x8xf32>
    %30 = arith.truncf %29 : vector<1x8x8xf32> to vector<1x8x8xbf16>
    %cst_23 = arith.constant dense<0.000000e+00> : vector<1x8x8xf32>
    %31 = tpu.matmul %26, %28, %cst_23 {dimension_numbers = #tpu.dot_dimension_numbers<[2], [2], [1], [1], [0, 0, 0, 1, 1, 1], [0], [0]>} : vector<1x8x8xbf16>, vector<1x8x8xbf16>, vector<1x8x8xf32> -> vector<1x8x8xf32>
    %cst_24 = arith.constant dense<0xFF800000> : vector<1x8xf32>
    %32 = vector.multi_reduction <maximumf>, %31, %cst_24 [2] : vector<1x8x8xf32> to vector<1x8xf32>
    %33 = vector.shape_cast %32 : vector<1x8xf32> to vector<1x8x1xf32>
    %34 = vector.broadcast %33 : vector<1x8x1xf32> to vector<1x8x8xf32>
    %35 = arith.subf %31, %34 : vector<1x8x8xf32>
    %36 = math.exp %35 : vector<1x8x8xf32>
    %cst_25 = arith.constant dense<0.000000e+00> : vector<1x8xf32>
    %37 = vector.multi_reduction <add>, %36, %cst_25 [2] : vector<1x8x8xf32> to vector<1x8xf32>
    %38 = vector.shape_cast %37 : vector<1x8xf32> to vector<1x8x1xf32>
    %39 = tpu.reciprocal %38 {approx = true} : vector<1x8x1xf32> -> vector<1x8x1xf32>
    %40 = arith.truncf %36 : vector<1x8x8xf32> to vector<1x8x8xbf16>
    %cst_26 = arith.constant dense<0.000000e+00> : vector<1x8x8xf32>
    %41 = tpu.matmul %40, %30, %cst_26 {dimension_numbers = #tpu.dot_dimension_numbers<[2], [1], [1], [2], [0, 0, 0, 1, 1, 2], [0], [0]>} : vector<1x8x8xbf16>, vector<1x8x8xbf16>, vector<1x8x8xf32> -> vector<1x8x8xf32>
    %42 = vector.broadcast %39 : vector<1x8x1xf32> to vector<1x8x8xf32>
    %43 = arith.mulf %41, %42 : vector<1x8x8xf32>
    %44 = vector.shape_cast %43 : vector<1x8x8xf32> to vector<8x8xf32>
    %45 = arith.truncf %44 : vector<8x8xf32> to vector<8x8xbf16>
    %c0_27 = arith.constant 0 : index
    %c0_28 = arith.constant 0 : index
    %c0_29 = arith.constant 0 : index
    %46 = vector.load %arg8[%c0_27, %c0_28, %c0_29] : memref<4x8x32xbf16, #tpu.memory_space<vmem>>, vector<1x8x32xbf16>
    %47 = vector.shape_cast %46 : vector<1x8x32xbf16> to vector<8x32xbf16>
    %cst_30 = arith.constant dense<0.000000e+00> : vector<8x32xf32>
    %48 = tpu.matmul %45, %47, %cst_30 {dimension_numbers = #tpu.dot_dimension_numbers<[1], [0], [0], [1], [0, 0, 1, 1], [], []>} : vector<8x8xbf16>, vector<8x32xbf16>, vector<8x32xf32> -> vector<8x32xf32>
    %49 = arith.addf %3, %48 : vector<8x32xf32>
    %c1 = arith.constant 1 : index
    %c0_31 = arith.constant 0 : index
    %c0_32 = arith.constant 0 : index
    %50 = vector.load %arg2[%c1, %c0_31, %c0_32] : memref<4x32x8xbf16, #tpu.memory_space<vmem>>, vector<1x32x8xbf16>
    %51 = vector.shape_cast %50 : vector<1x32x8xbf16> to vector<32x8xbf16>
    %cst_33 = arith.constant dense<0.000000e+00> : vector<8x8xf32>
    %52 = tpu.matmul %2, %51, %cst_33 {dimension_numbers = #tpu.dot_dimension_numbers<[1], [0], [0], [1], [0, 0, 1, 1], [], []>} : vector<8x32xbf16>, vector<32x8xbf16>, vector<8x8xf32> -> vector<8x8xf32>
    %c1_34 = arith.constant 1 : index
    %c0_35 = arith.constant 0 : index
    %c0_36 = arith.constant 0 : index
    %53 = vector.load %arg5[%c1_34, %c0_35, %c0_36] : memref<4x1x8xf32, #tpu.memory_space<vmem>>, vector<1x1x8xf32>
    %54 = vector.shape_cast %53 : vector<1x1x8xf32> to vector<1x8xf32>
    %55 = vector.broadcast %54 : vector<1x8xf32> to vector<8x8xf32>
    %56 = arith.addf %52, %55 : vector<8x8xf32>
    %c1_37 = arith.constant 1 : index
    %c0_38 = arith.constant 0 : index
    %c0_39 = arith.constant 0 : index
    %57 = vector.load %arg3[%c1_37, %c0_38, %c0_39] : memref<4x32x8xbf16, #tpu.memory_space<vmem>>, vector<1x32x8xbf16>
    %58 = vector.shape_cast %57 : vector<1x32x8xbf16> to vector<32x8xbf16>
    %cst_40 = arith.constant dense<0.000000e+00> : vector<8x8xf32>
    %59 = tpu.matmul %2, %58, %cst_40 {dimension_numbers = #tpu.dot_dimension_numbers<[1], [0], [0], [1], [0, 0, 1, 1], [], []>} : vector<8x32xbf16>, vector<32x8xbf16>, vector<8x8xf32> -> vector<8x8xf32>
    %c1_41 = arith.constant 1 : index
    %c0_42 = arith.constant 0 : index
    %c0_43 = arith.constant 0 : index
    %60 = vector.load %arg6[%c1_41, %c0_42, %c0_43] : memref<4x1x8xf32, #tpu.memory_space<vmem>>, vector<1x1x8xf32>
    %61 = vector.shape_cast %60 : vector<1x1x8xf32> to vector<1x8xf32>
    %62 = vector.broadcast %61 : vector<1x8xf32> to vector<8x8xf32>
    %63 = arith.addf %59, %62 : vector<8x8xf32>
    %c1_44 = arith.constant 1 : index
    %c0_45 = arith.constant 0 : index
    %c0_46 = arith.constant 0 : index
    %64 = vector.load %arg4[%c1_44, %c0_45, %c0_46] : memref<4x32x8xbf16, #tpu.memory_space<vmem>>, vector<1x32x8xbf16>
    %65 = vector.shape_cast %64 : vector<1x32x8xbf16> to vector<32x8xbf16>
    %cst_47 = arith.constant dense<0.000000e+00> : vector<8x8xf32>
    %66 = tpu.matmul %2, %65, %cst_47 {dimension_numbers = #tpu.dot_dimension_numbers<[1], [0], [0], [1], [0, 0, 1, 1], [], []>} : vector<8x32xbf16>, vector<32x8xbf16>, vector<8x8xf32> -> vector<8x8xf32>
    %c1_48 = arith.constant 1 : index
    %c0_49 = arith.constant 0 : index
    %c0_50 = arith.constant 0 : index
    %67 = vector.load %arg7[%c1_48, %c0_49, %c0_50] : memref<4x1x8xf32, #tpu.memory_space<vmem>>, vector<1x1x8xf32>
    %68 = vector.shape_cast %67 : vector<1x1x8xf32> to vector<1x8xf32>
    %69 = vector.broadcast %68 : vector<1x8xf32> to vector<8x8xf32>
    %70 = arith.addf %66, %69 : vector<8x8xf32>
    %71 = vector.shape_cast %56 : vector<8x8xf32> to vector<1x8x8xf32>
    %72 = arith.truncf %71 : vector<1x8x8xf32> to vector<1x8x8xbf16>
    %73 = vector.shape_cast %63 : vector<8x8xf32> to vector<1x8x8xf32>
    %74 = arith.truncf %73 : vector<1x8x8xf32> to vector<1x8x8xbf16>
    %75 = vector.shape_cast %70 : vector<8x8xf32> to vector<1x8x8xf32>
    %76 = arith.truncf %75 : vector<1x8x8xf32> to vector<1x8x8xbf16>
    %cst_51 = arith.constant dense<0.000000e+00> : vector<1x8x8xf32>
    %77 = tpu.matmul %72, %74, %cst_51 {dimension_numbers = #tpu.dot_dimension_numbers<[2], [2], [1], [1], [0, 0, 0, 1, 1, 1], [0], [0]>} : vector<1x8x8xbf16>, vector<1x8x8xbf16>, vector<1x8x8xf32> -> vector<1x8x8xf32>
    %cst_52 = arith.constant dense<0xFF800000> : vector<1x8xf32>
    %78 = vector.multi_reduction <maximumf>, %77, %cst_52 [2] : vector<1x8x8xf32> to vector<1x8xf32>
    %79 = vector.shape_cast %78 : vector<1x8xf32> to vector<1x8x1xf32>
    %80 = vector.broadcast %79 : vector<1x8x1xf32> to vector<1x8x8xf32>
    %81 = arith.subf %77, %80 : vector<1x8x8xf32>
    %82 = math.exp %81 : vector<1x8x8xf32>
    %cst_53 = arith.constant dense<0.000000e+00> : vector<1x8xf32>
    %83 = vector.multi_reduction <add>, %82, %cst_53 [2] : vector<1x8x8xf32> to vector<1x8xf32>
    %84 = vector.shape_cast %83 : vector<1x8xf32> to vector<1x8x1xf32>
    %85 = tpu.reciprocal %84 {approx = true} : vector<1x8x1xf32> -> vector<1x8x1xf32>
    %86 = arith.truncf %82 : vector<1x8x8xf32> to vector<1x8x8xbf16>
    %cst_54 = arith.constant dense<0.000000e+00> : vector<1x8x8xf32>
    %87 = tpu.matmul %86, %76, %cst_54 {dimension_numbers = #tpu.dot_dimension_numbers<[2], [1], [1], [2], [0, 0, 0, 1, 1, 2], [0], [0]>} : vector<1x8x8xbf16>, vector<1x8x8xbf16>, vector<1x8x8xf32> -> vector<1x8x8xf32>
    %88 = vector.broadcast %85 : vector<1x8x1xf32> to vector<1x8x8xf32>
    %89 = arith.mulf %87, %88 : vector<1x8x8xf32>
    %90 = vector.shape_cast %89 : vector<1x8x8xf32> to vector<8x8xf32>
    %91 = arith.truncf %90 : vector<8x8xf32> to vector<8x8xbf16>
    %c1_55 = arith.constant 1 : index
    %c0_56 = arith.constant 0 : index
    %c0_57 = arith.constant 0 : index
    %92 = vector.load %arg8[%c1_55, %c0_56, %c0_57] : memref<4x8x32xbf16, #tpu.memory_space<vmem>>, vector<1x8x32xbf16>
    %93 = vector.shape_cast %92 : vector<1x8x32xbf16> to vector<8x32xbf16>
    %cst_58 = arith.constant dense<0.000000e+00> : vector<8x32xf32>
    %94 = tpu.matmul %91, %93, %cst_58 {dimension_numbers = #tpu.dot_dimension_numbers<[1], [0], [0], [1], [0, 0, 1, 1], [], []>} : vector<8x8xbf16>, vector<8x32xbf16>, vector<8x32xf32> -> vector<8x32xf32>
    %95 = arith.addf %49, %94 : vector<8x32xf32>
    %c2 = arith.constant 2 : index
    %c0_59 = arith.constant 0 : index
    %c0_60 = arith.constant 0 : index
    %96 = vector.load %arg2[%c2, %c0_59, %c0_60] : memref<4x32x8xbf16, #tpu.memory_space<vmem>>, vector<1x32x8xbf16>
    %97 = vector.shape_cast %96 : vector<1x32x8xbf16> to vector<32x8xbf16>
    %cst_61 = arith.constant dense<0.000000e+00> : vector<8x8xf32>
    %98 = tpu.matmul %2, %97, %cst_61 {dimension_numbers = #tpu.dot_dimension_numbers<[1], [0], [0], [1], [0, 0, 1, 1], [], []>} : vector<8x32xbf16>, vector<32x8xbf16>, vector<8x8xf32> -> vector<8x8xf32>
    %c2_62 = arith.constant 2 : index
    %c0_63 = arith.constant 0 : index
    %c0_64 = arith.constant 0 : index
    %99 = vector.load %arg5[%c2_62, %c0_63, %c0_64] : memref<4x1x8xf32, #tpu.memory_space<vmem>>, vector<1x1x8xf32>
    %100 = vector.shape_cast %99 : vector<1x1x8xf32> to vector<1x8xf32>
    %101 = vector.broadcast %100 : vector<1x8xf32> to vector<8x8xf32>
    %102 = arith.addf %98, %101 : vector<8x8xf32>
    %c2_65 = arith.constant 2 : index
    %c0_66 = arith.constant 0 : index
    %c0_67 = arith.constant 0 : index
    %103 = vector.load %arg3[%c2_65, %c0_66, %c0_67] : memref<4x32x8xbf16, #tpu.memory_space<vmem>>, vector<1x32x8xbf16>
    %104 = vector.shape_cast %103 : vector<1x32x8xbf16> to vector<32x8xbf16>
    %cst_68 = arith.constant dense<0.000000e+00> : vector<8x8xf32>
    %105 = tpu.matmul %2, %104, %cst_68 {dimension_numbers = #tpu.dot_dimension_numbers<[1], [0], [0], [1], [0, 0, 1, 1], [], []>} : vector<8x32xbf16>, vector<32x8xbf16>, vector<8x8xf32> -> vector<8x8xf32>
    %c2_69 = arith.constant 2 : index
    %c0_70 = arith.constant 0 : index
    %c0_71 = arith.constant 0 : index
    %106 = vector.load %arg6[%c2_69, %c0_70, %c0_71] : memref<4x1x8xf32, #tpu.memory_space<vmem>>, vector<1x1x8xf32>
    %107 = vector.shape_cast %106 : vector<1x1x8xf32> to vector<1x8xf32>
    %108 = vector.broadcast %107 : vector<1x8xf32> to vector<8x8xf32>
    %109 = arith.addf %105, %108 : vector<8x8xf32>
    %c2_72 = arith.constant 2 : index
    %c0_73 = arith.constant 0 : index
    %c0_74 = arith.constant 0 : index
    %110 = vector.load %arg4[%c2_72, %c0_73, %c0_74] : memref<4x32x8xbf16, #tpu.memory_space<vmem>>, vector<1x32x8xbf16>
    %111 = vector.shape_cast %110 : vector<1x32x8xbf16> to vector<32x8xbf16>
    %cst_75 = arith.constant dense<0.000000e+00> : vector<8x8xf32>
    %112 = tpu.matmul %2, %111, %cst_75 {dimension_numbers = #tpu.dot_dimension_numbers<[1], [0], [0], [1], [0, 0, 1, 1], [], []>} : vector<8x32xbf16>, vector<32x8xbf16>, vector<8x8xf32> -> vector<8x8xf32>
    %c2_76 = arith.constant 2 : index
    %c0_77 = arith.constant 0 : index
    %c0_78 = arith.constant 0 : index
    %113 = vector.load %arg7[%c2_76, %c0_77, %c0_78] : memref<4x1x8xf32, #tpu.memory_space<vmem>>, vector<1x1x8xf32>
    %114 = vector.shape_cast %113 : vector<1x1x8xf32> to vector<1x8xf32>
    %115 = vector.broadcast %114 : vector<1x8xf32> to vector<8x8xf32>
    %116 = arith.addf %112, %115 : vector<8x8xf32>
    %117 = vector.shape_cast %102 : vector<8x8xf32> to vector<1x8x8xf32>
    %118 = arith.truncf %117 : vector<1x8x8xf32> to vector<1x8x8xbf16>
    %119 = vector.shape_cast %109 : vector<8x8xf32> to vector<1x8x8xf32>
    %120 = arith.truncf %119 : vector<1x8x8xf32> to vector<1x8x8xbf16>
    %121 = vector.shape_cast %116 : vector<8x8xf32> to vector<1x8x8xf32>
    %122 = arith.truncf %121 : vector<1x8x8xf32> to vector<1x8x8xbf16>
    %cst_79 = arith.constant dense<0.000000e+00> : vector<1x8x8xf32>
    %123 = tpu.matmul %118, %120, %cst_79 {dimension_numbers = #tpu.dot_dimension_numbers<[2], [2], [1], [1], [0, 0, 0, 1, 1, 1], [0], [0]>} : vector<1x8x8xbf16>, vector<1x8x8xbf16>, vector<1x8x8xf32> -> vector<1x8x8xf32>
    %cst_80 = arith.constant dense<0xFF800000> : vector<1x8xf32>
    %124 = vector.multi_reduction <maximumf>, %123, %cst_80 [2] : vector<1x8x8xf32> to vector<1x8xf32>
    %125 = vector.shape_cast %124 : vector<1x8xf32> to vector<1x8x1xf32>
    %126 = vector.broadcast %125 : vector<1x8x1xf32> to vector<1x8x8xf32>
    %127 = arith.subf %123, %126 : vector<1x8x8xf32>
    %128 = math.exp %127 : vector<1x8x8xf32>
    %cst_81 = arith.constant dense<0.000000e+00> : vector<1x8xf32>
    %129 = vector.multi_reduction <add>, %128, %cst_81 [2] : vector<1x8x8xf32> to vector<1x8xf32>
    %130 = vector.shape_cast %129 : vector<1x8xf32> to vector<1x8x1xf32>
    %131 = tpu.reciprocal %130 {approx = true} : vector<1x8x1xf32> -> vector<1x8x1xf32>
    %132 = arith.truncf %128 : vector<1x8x8xf32> to vector<1x8x8xbf16>
    %cst_82 = arith.constant dense<0.000000e+00> : vector<1x8x8xf32>
    %133 = tpu.matmul %132, %122, %cst_82 {dimension_numbers = #tpu.dot_dimension_numbers<[2], [1], [1], [2], [0, 0, 0, 1, 1, 2], [0], [0]>} : vector<1x8x8xbf16>, vector<1x8x8xbf16>, vector<1x8x8xf32> -> vector<1x8x8xf32>
    %134 = vector.broadcast %131 : vector<1x8x1xf32> to vector<1x8x8xf32>
    %135 = arith.mulf %133, %134 : vector<1x8x8xf32>
    %136 = vector.shape_cast %135 : vector<1x8x8xf32> to vector<8x8xf32>
    %137 = arith.truncf %136 : vector<8x8xf32> to vector<8x8xbf16>
    %c2_83 = arith.constant 2 : index
    %c0_84 = arith.constant 0 : index
    %c0_85 = arith.constant 0 : index
    %138 = vector.load %arg8[%c2_83, %c0_84, %c0_85] : memref<4x8x32xbf16, #tpu.memory_space<vmem>>, vector<1x8x32xbf16>
    %139 = vector.shape_cast %138 : vector<1x8x32xbf16> to vector<8x32xbf16>
    %cst_86 = arith.constant dense<0.000000e+00> : vector<8x32xf32>
    %140 = tpu.matmul %137, %139, %cst_86 {dimension_numbers = #tpu.dot_dimension_numbers<[1], [0], [0], [1], [0, 0, 1, 1], [], []>} : vector<8x8xbf16>, vector<8x32xbf16>, vector<8x32xf32> -> vector<8x32xf32>
    %141 = arith.addf %95, %140 : vector<8x32xf32>
    %c3 = arith.constant 3 : index
    %c0_87 = arith.constant 0 : index
    %c0_88 = arith.constant 0 : index
    %142 = vector.load %arg2[%c3, %c0_87, %c0_88] : memref<4x32x8xbf16, #tpu.memory_space<vmem>>, vector<1x32x8xbf16>
    %143 = vector.shape_cast %142 : vector<1x32x8xbf16> to vector<32x8xbf16>
    %cst_89 = arith.constant dense<0.000000e+00> : vector<8x8xf32>
    %144 = tpu.matmul %2, %143, %cst_89 {dimension_numbers = #tpu.dot_dimension_numbers<[1], [0], [0], [1], [0, 0, 1, 1], [], []>} : vector<8x32xbf16>, vector<32x8xbf16>, vector<8x8xf32> -> vector<8x8xf32>
    %c3_90 = arith.constant 3 : index
    %c0_91 = arith.constant 0 : index
    %c0_92 = arith.constant 0 : index
    %145 = vector.load %arg5[%c3_90, %c0_91, %c0_92] : memref<4x1x8xf32, #tpu.memory_space<vmem>>, vector<1x1x8xf32>
    %146 = vector.shape_cast %145 : vector<1x1x8xf32> to vector<1x8xf32>
    %147 = vector.broadcast %146 : vector<1x8xf32> to vector<8x8xf32>
    %148 = arith.addf %144, %147 : vector<8x8xf32>
    %c3_93 = arith.constant 3 : index
    %c0_94 = arith.constant 0 : index
    %c0_95 = arith.constant 0 : index
    %149 = vector.load %arg3[%c3_93, %c0_94, %c0_95] : memref<4x32x8xbf16, #tpu.memory_space<vmem>>, vector<1x32x8xbf16>
    %150 = vector.shape_cast %149 : vector<1x32x8xbf16> to vector<32x8xbf16>
    %cst_96 = arith.constant dense<0.000000e+00> : vector<8x8xf32>
    %151 = tpu.matmul %2, %150, %cst_96 {dimension_numbers = #tpu.dot_dimension_numbers<[1], [0], [0], [1], [0, 0, 1, 1], [], []>} : vector<8x32xbf16>, vector<32x8xbf16>, vector<8x8xf32> -> vector<8x8xf32>
    %c3_97 = arith.constant 3 : index
    %c0_98 = arith.constant 0 : index
    %c0_99 = arith.constant 0 : index
    %152 = vector.load %arg6[%c3_97, %c0_98, %c0_99] : memref<4x1x8xf32, #tpu.memory_space<vmem>>, vector<1x1x8xf32>
    %153 = vector.shape_cast %152 : vector<1x1x8xf32> to vector<1x8xf32>
    %154 = vector.broadcast %153 : vector<1x8xf32> to vector<8x8xf32>
    %155 = arith.addf %151, %154 : vector<8x8xf32>
    %c3_100 = arith.constant 3 : index
    %c0_101 = arith.constant 0 : index
    %c0_102 = arith.constant 0 : index
    %156 = vector.load %arg4[%c3_100, %c0_101, %c0_102] : memref<4x32x8xbf16, #tpu.memory_space<vmem>>, vector<1x32x8xbf16>
    %157 = vector.shape_cast %156 : vector<1x32x8xbf16> to vector<32x8xbf16>
    %cst_103 = arith.constant dense<0.000000e+00> : vector<8x8xf32>
    %158 = tpu.matmul %2, %157, %cst_103 {dimension_numbers = #tpu.dot_dimension_numbers<[1], [0], [0], [1], [0, 0, 1, 1], [], []>} : vector<8x32xbf16>, vector<32x8xbf16>, vector<8x8xf32> -> vector<8x8xf32>
    %c3_104 = arith.constant 3 : index
    %c0_105 = arith.constant 0 : index
    %c0_106 = arith.constant 0 : index
    %159 = vector.load %arg7[%c3_104, %c0_105, %c0_106] : memref<4x1x8xf32, #tpu.memory_space<vmem>>, vector<1x1x8xf32>
    %160 = vector.shape_cast %159 : vector<1x1x8xf32> to vector<1x8xf32>
    %161 = vector.broadcast %160 : vector<1x8xf32> to vector<8x8xf32>
    %162 = arith.addf %158, %161 : vector<8x8xf32>
    %163 = vector.shape_cast %148 : vector<8x8xf32> to vector<1x8x8xf32>
    %164 = arith.truncf %163 : vector<1x8x8xf32> to vector<1x8x8xbf16>
    %165 = vector.shape_cast %155 : vector<8x8xf32> to vector<1x8x8xf32>
    %166 = arith.truncf %165 : vector<1x8x8xf32> to vector<1x8x8xbf16>
    %167 = vector.shape_cast %162 : vector<8x8xf32> to vector<1x8x8xf32>
    %168 = arith.truncf %167 : vector<1x8x8xf32> to vector<1x8x8xbf16>
    %cst_107 = arith.constant dense<0.000000e+00> : vector<1x8x8xf32>
    %169 = tpu.matmul %164, %166, %cst_107 {dimension_numbers = #tpu.dot_dimension_numbers<[2], [2], [1], [1], [0, 0, 0, 1, 1, 1], [0], [0]>} : vector<1x8x8xbf16>, vector<1x8x8xbf16>, vector<1x8x8xf32> -> vector<1x8x8xf32>
    %cst_108 = arith.constant dense<0xFF800000> : vector<1x8xf32>
    %170 = vector.multi_reduction <maximumf>, %169, %cst_108 [2] : vector<1x8x8xf32> to vector<1x8xf32>
    %171 = vector.shape_cast %170 : vector<1x8xf32> to vector<1x8x1xf32>
    %172 = vector.broadcast %171 : vector<1x8x1xf32> to vector<1x8x8xf32>
    %173 = arith.subf %169, %172 : vector<1x8x8xf32>
    %174 = math.exp %173 : vector<1x8x8xf32>
    %cst_109 = arith.constant dense<0.000000e+00> : vector<1x8xf32>
    %175 = vector.multi_reduction <add>, %174, %cst_109 [2] : vector<1x8x8xf32> to vector<1x8xf32>
    %176 = vector.shape_cast %175 : vector<1x8xf32> to vector<1x8x1xf32>
    %177 = tpu.reciprocal %176 {approx = true} : vector<1x8x1xf32> -> vector<1x8x1xf32>
    %178 = arith.truncf %174 : vector<1x8x8xf32> to vector<1x8x8xbf16>
    %cst_110 = arith.constant dense<0.000000e+00> : vector<1x8x8xf32>
    %179 = tpu.matmul %178, %168, %cst_110 {dimension_numbers = #tpu.dot_dimension_numbers<[2], [1], [1], [2], [0, 0, 0, 1, 1, 2], [0], [0]>} : vector<1x8x8xbf16>, vector<1x8x8xbf16>, vector<1x8x8xf32> -> vector<1x8x8xf32>
    %180 = vector.broadcast %177 : vector<1x8x1xf32> to vector<1x8x8xf32>
    %181 = arith.mulf %179, %180 : vector<1x8x8xf32>
    %182 = vector.shape_cast %181 : vector<1x8x8xf32> to vector<8x8xf32>
    %183 = arith.truncf %182 : vector<8x8xf32> to vector<8x8xbf16>
    %c3_111 = arith.constant 3 : index
    %c0_112 = arith.constant 0 : index
    %c0_113 = arith.constant 0 : index
    %184 = vector.load %arg8[%c3_111, %c0_112, %c0_113] : memref<4x8x32xbf16, #tpu.memory_space<vmem>>, vector<1x8x32xbf16>
    %185 = vector.shape_cast %184 : vector<1x8x32xbf16> to vector<8x32xbf16>
    %cst_114 = arith.constant dense<0.000000e+00> : vector<8x32xf32>
    %186 = tpu.matmul %183, %185, %cst_114 {dimension_numbers = #tpu.dot_dimension_numbers<[1], [0], [0], [1], [0, 0, 1, 1], [], []>} : vector<8x8xbf16>, vector<8x32xbf16>, vector<8x32xf32> -> vector<8x32xf32>
    %187 = arith.addf %141, %186 : vector<8x32xf32>
    %c0_115 = arith.constant 0 : index
    %c0_116 = arith.constant 0 : index
    %188 = vector.load %arg9[%c0_115, %c0_116] : memref<1x32xf32, #tpu.memory_space<vmem>>, vector<1x32xf32>
    %189 = vector.broadcast %188 : vector<1x32xf32> to vector<8x32xf32>
    %190 = arith.addf %187, %189 : vector<8x32xf32>
    %191 = vector.shape_cast %190 : vector<8x32xf32> to vector<1x8x32xf32>
    %c0_117 = arith.constant 0 : index
    %c0_118 = arith.constant 0 : index
    %c0_119 = arith.constant 0 : index
    %192 = vector.load %arg10[%c0_117, %c0_118, %c0_119] : memref<1x8x32xf32, #tpu.memory_space<vmem>>, vector<1x8x32xf32>
    tpu.vector_store %arg10[%c0_117, %c0_118, %c0_119], %191 {strides = array<i32>} : memref<1x8x32xf32, #tpu.memory_space<vmem>>, vector<1x8x32xf32>,
    return
  }
  func.func @transform_0(%arg0: i32) -> (i32, i32, i32) {
    %c0_i32 = arith.constant 0 : i32
    %c0_i32_0 = arith.constant 0 : i32
    %c0_i32_1 = arith.constant 0 : i32
    return %arg0, %c0_i32, %c0_i32_0 : i32, i32, i32
  }
  func.func @transform_1(%arg0: i32) -> (i32, i32, i32) {
    %c0_i32 = arith.constant 0 : i32
    %c0_i32_0 = arith.constant 0 : i32
    %c0_i32_1 = arith.constant 0 : i32
    %c0_i32_2 = arith.constant 0 : i32
    return %c0_i32, %c0_i32_0, %c0_i32_1 : i32, i32, i32
  }
  func.func @transform_2(%arg0: i32) -> (i32, i32, i32) {
    %c0_i32 = arith.constant 0 : i32
    %c0_i32_0 = arith.constant 0 : i32
    %c0_i32_1 = arith.constant 0 : i32
    %c0_i32_2 = arith.constant 0 : i32
    return %c0_i32, %c0_i32_0, %c0_i32_1 : i32, i32, i32
  }
  func.func @transform_3(%arg0: i32) -> (i32, i32, i32) {
    %c0_i32 = arith.constant 0 : i32
    %c0_i32_0 = arith.constant 0 : i32
    %c0_i32_1 = arith.constant 0 : i32
    %c0_i32_2 = arith.constant 0 : i32
    return %c0_i32, %c0_i32_0, %c0_i32_1 : i32, i32, i32
  }
  func.func @transform_4(%arg0: i32) -> (i32, i32, i32) {
    %c0_i32 = arith.constant 0 : i32
    %c0_i32_0 = arith.constant 0 : i32
    %c0_i32_1 = arith.constant 0 : i32
    %c0_i32_2 = arith.constant 0 : i32
    return %c0_i32, %c0_i32_0, %c0_i32_1 : i32, i32, i32
  }
  func.func @transform_5(%arg0: i32) -> (i32, i32, i32) {
    %c0_i32 = arith.constant 0 : i32
    %c0_i32_0 = arith.constant 0 : i32
    %c0_i32_1 = arith.constant 0 : i32
    %c0_i32_2 = arith.constant 0 : i32
    return %c0_i32, %c0_i32_0, %c0_i32_1 : i32, i32, i32
  }
  func.func @transform_6(%arg0: i32) -> (i32, i32, i32) {
    %c0_i32 = arith.constant 0 : i32
    %c0_i32_0 = arith.constant 0 : i32
    %c0_i32_1 = arith.constant 0 : i32
    %c0_i32_2 = arith.constant 0 : i32
    return %c0_i32, %c0_i32_0, %c0_i32_1 : i32, i32, i32
  }
  func.func @transform_7(%arg0: i32) -> (i32, i32, i32) {
    %c0_i32 = arith.constant 0 : i32
    %c0_i32_0 = arith.constant 0 : i32
    %c0_i32_1 = arith.constant 0 : i32
    %c0_i32_2 = arith.constant 0 : i32
    return %c0_i32, %c0_i32_0, %c0_i32_1 : i32, i32, i32
  }
  func.func @transform_8(%arg0: i32) -> (i32, i32) {
    %c0_i32 = arith.constant 0 : i32
    %c0_i32_0 = arith.constant 0 : i32
    %c0_i32_1 = arith.constant 0 : i32
    return %c0_i32, %c0_i32_0 : i32, i32
  }
  func.func @transform_9(%arg0: i32) -> (i32, i32, i32) {
    %c0_i32 = arith.constant 0 : i32
    %c0_i32_0 = arith.constant 0 : i32
    %c0_i32_1 = arith.constant 0 : i32
    return %arg0, %c0_i32, %c0_i32_0 : i32, i32, i32
  }
}

</mosaic_0001>

<llo_original>
// kernel: tpu_custom_call.1
$region0: #{tpu_custom_call.1}
  #allocation0 [shape = 'u32[]', space=smem, size = 0x4, offset = 0x4, fixed_abs, tag = 'smem constant byte address 0x4 - core index']
  #allocation1 [shape = 'u32[144,128]{1,0:T(1,128)}', space=vmem, size = 0x12000, scoped, tag = 'internal scratch']
  %s0 = inlined_call_operand.hbm [shape: f32[2,8,32], index: 0, kind: input, shape index: {}]
  %s1 = inlined_call_operand.hbm [shape: bf16[4,32,8], index: 1, kind: input, shape index: {}]
  %s2 = inlined_call_operand.hbm [shape: bf16[4,32,8], index: 2, kind: input, shape index: {}]
  %s3 = inlined_call_operand.hbm [shape: bf16[4,32,8], index: 3, kind: input, shape index: {}]
  %s4 = inlined_call_operand.hbm [shape: f32[4,1,8], index: 4, kind: input, shape index: {}]
  %s5 = inlined_call_operand.hbm [shape: f32[4,1,8], index: 5, kind: input, shape index: {}]
  %s6 = inlined_call_operand.hbm [shape: f32[4,1,8], index: 6, kind: input, shape index: {}]
  %s7 = inlined_call_operand.hbm [shape: bf16[4,8,32], index: 7, kind: input, shape index: {}]
  %s8 = inlined_call_operand.hbm [shape: f32[1,32], index: 8, kind: input, shape index: {}]
  %s9 = inlined_call_operand.hbm [shape: f32[2,8,32], index: 9, kind: output, shape index: {}]
  %s10 = sld [smem:[#allocation0]]
  $region105: #{tpu_custom_call.1} parent=0
    _
  %s12 = ssub.s32 1, %s10
  %s13 = scalar_select 0, %s12, %s10
  $region1: #{tpu_custom_call.1} parent=0
    #allocation2 [shape = 'u8[8192]{0}', space=vmem, size = 0x2000, scoped, tag = 'input window, operand 0']
    #allocation3 [shape = 's32[2]{0}', space=sflag, size = 0x8, scoped, tag = 'scoped memory for tpu_custom_call.1']
    #allocation4 [shape = 's32[2]{0}', space=sflag, size = 0x8, scoped, tag = 'scoped memory for tpu_custom_call.1']
    #allocation5 [shape = 'u8[32768]{0}', space=vmem, size = 0x8000, scoped, tag = 'input window, operand 1, single buffered']
    #allocation6 [shape = 's32[1]{0}', space=sflag, size = 0x4, scoped, tag = 'scoped memory for tpu_custom_call.1']
    #allocation7 [shape = 'u8[32768]{0}', space=vmem, size = 0x8000, scoped, tag = 'input window, operand 2, single buffered']
    #allocation8 [shape = 'u8[32768]{0}', space=vmem, size = 0x8000, scoped, tag = 'input window, operand 3, single buffered']
    #allocation9 [shape = 's32[1]{0}', space=sflag, size = 0x4, scoped, tag = 'scoped memory for tpu_custom_call.1']
    #allocation10 [shape = 'u8[2048]{0}', space=vmem, size = 0x800, scoped, tag = 'input window, operand 4, single buffered']
    #allocation11 [shape = 'u8[2048]{0}', space=vmem, size = 0x800, scoped, tag = 'input window, operand 5, single buffered']
    #allocation12 [shape = 's32[1]{0}', space=sflag, size = 0x4, scoped, tag = 'scoped memory for tpu_custom_call.1']
    #allocation13 [shape = 'u8[2048]{0}', space=vmem, size = 0x800, scoped, tag = 'input window, operand 6, single buffered']
    #allocation14 [shape = 'u8[8192]{0}', space=vmem, size = 0x2000, scoped, tag = 'input window, operand 7, single buffered']
    #allocation15 [shape = 's32[1]{0}', space=sflag, size = 0x4, scoped, tag = 'scoped memory for tpu_custom_call.1']
    #allocation16 [shape = 'u8[512]{0}', space=vmem, size = 0x400, scoped, tag = 'input window, operand 8, single buffered']
    #allocation17 [shape = 'u8[8192]{0}', space=vmem, size = 0x2000, scoped, tag = 'output window, operand 0']
    %14 = vsyncpa [#allocation3], 0
    %s15 = scalar_lea.sflag [#allocation3], 1
    %16 = vsyncpa %s15, 0
    %17 = vsyncpa [#allocation6], 0
    %18 = vsyncpa [#allocation9], 0
    %19 = vsyncpa [#allocation12], 0
    %20 = vsyncpa [#allocation15], 0
    %21 = vsyncpa [#allocation4], 0
    %s22 = scalar_lea.sflag [#allocation4], 1
    %23 = vsyncpa %s22, 0
    loop: start=0, step=1, limit=4
    $region2: #{tpu_custom_call.1} parent=1 // loop_pre_header
      _
    $region3: #{tpu_custom_call.1} parent=1 // loop_header
      %s25 = sphi 0, %s29
      %p26 = scmp.ge.s32.totalorder %s25, 4
      %s35 = sphi 0, %s37
      %s38 = sphi 0, %s35
      %s39 = sphi 0, %s38
      %s55 = sphi 0, %s39
      %s59 = sphi 0, %s59
      %s61 = sphi 0, %s59
      %s62 = sphi 0, %s61
      %s76 = sphi 0, %s62
      %s80 = sphi 0, %s80
      %s82 = sphi 0, %s80
      %s83 = sphi 0, %s82
      %s97 = sphi 0, %s83
      %s101 = sphi 0, %s101
      %s103 = sphi 0, %s101
      %s104 = sphi 0, %s103
      %s118 = sphi 0, %s104
      %s122 = sphi 0, %s122
      %s124 = sphi 0, %s122
      %s125 = sphi 0, %s124
      %s139 = sphi 0, %s125
      %s143 = sphi 0, %s143
      %s145 = sphi 0, %s143
      %s146 = sphi 0, %s145
      %s160 = sphi 0, %s146
      %s164 = sphi 0, %s164
      %s166 = sphi 0, %s164
      %s167 = sphi 0, %s166
      %s181 = sphi 0, %s167
      %s185 = sphi 0, %s185
      %s187 = sphi 0, %s185
      %s188 = sphi 0, %s187
      %s202 = sphi 0, %s188
      %s206 = sphi 0, %s206
      %s208 = sphi 0, %s206
      %s209 = sphi 0, %s208
      %s223 = sphi 0, %s209
      %s229 = sphi 0, %s231
      %s232 = sphi 0, %s229
      %s233 = sphi 0, %s232
      %s249 = sphi 0, %s233
    $region4: #{tpu_custom_call.1} parent=1 // loop_header_branch
      %28 = sbr.rel (%p26) target = $region8
    $region5: #{tpu_custom_call.1} parent=1 // loop_body
      %s30 = ssub.s32 %s25, 1
      %s31 = ssub.s32 %s25, 2
      %s32 = sadd.s32 %s25, 1
      %s33 = ssub.s32 %s25, %s32
      %p34 = scmp.eq.s32.totalorder %s33, 0
      %s36 = sadd.s32 %s35, 1
      %s37 = scalar_select %p34, %s35, %s36
      %p40 = pneg %p34
      %p41 = scmp.eq.s32.totalorder %s25, 1
      %p42 = por %p40, %p41
      %p43 = scmp.ne.s32.totalorder %s35, %s38
      %p44 = scmp.eq.s32.totalorder %s25, 0
      %p45 = por %p43, %p44
      %p46 = scmp.ne.s32.totalorder %s35, %s38
      %p47 = scmp.eq.s32.totalorder %s30, 1
      %p48 = por %p46, %p47
      %p49 = scmp.ne.s32.totalorder %s38, %s39
      %p50 = scmp.eq.s32.totalorder %s30, 0
      %p51 = por %p49, %p50
      %p52 = scmp.ne.s32.totalorder %s38, %s39
      %p53 = scmp.eq.s32.totalorder %s31, 1
      %p54 = por %p52, %p53
      %p56 = scmp.ne.s32.totalorder %s39, %s55
      %p57 = scmp.eq.s32.totalorder %s31, 0
      %p58 = por %p56, %p57
      %s60 = sadd.s32 %s59, 1
      %p63 = scmp.eq.s32.totalorder %s25, 1
      %p64 = scmp.ne.s32.totalorder %s59, %s61
      %p65 = scmp.eq.s32.totalorder %s25, 0
      %p66 = por %p64, %p65
      %p67 = scmp.ne.s32.totalorder %s59, %s61
      %p68 = scmp.eq.s32.totalorder %s30, 1
      %p69 = por %p67, %p68
      %p70 = scmp.ne.s32.totalorder %s61, %s62
      %p71 = scmp.eq.s32.totalorder %s30, 0
      %p72 = por %p70, %p71
      %p73 = scmp.ne.s32.totalorder %s61, %s62
      %p74 = scmp.eq.s32.totalorder %s31, 1
      %p75 = por %p73, %p74
      %p77 = scmp.ne.s32.totalorder %s62, %s76
      %p78 = scmp.eq.s32.totalorder %s31, 0
      %p79 = por %p77, %p78
      %s81 = sadd.s32 %s80, 1
      %p84 = scmp.eq.s32.totalorder %s25, 1
      %p85 = scmp.ne.s32.totalorder %s80, %s82
      %p86 = scmp.eq.s32.totalorder %s25, 0
      %p87 = por %p85, %p86
      %p88 = scmp.ne.s32.totalorder %s80, %s82
      %p89 = scmp.eq.s32.totalorder %s30, 1
      %p90 = por %p88, %p89
      %p91 = scmp.ne.s32.totalorder %s82, %s83
      %p92 = scmp.eq.s32.totalorder %s30, 0
      %p93 = por %p91, %p92
      %p94 = scmp.ne.s32.totalorder %s82, %s83
      %p95 = scmp.eq.s32.totalorder %s31, 1
      %p96 = por %p94, %p95
      %p98 = scmp.ne.s32.totalorder %s83, %s97
      %p99 = scmp.eq.s32.totalorder %s31, 0
      %p100 = por %p98, %p99
      %s102 = sadd.s32 %s101, 1
      %p105 = scmp.eq.s32.totalorder %s25, 1
      %p106 = scmp.ne.s32.totalorder %s101, %s103
      %p107 = scmp.eq.s32.totalorder %s25, 0
      %p108 = por %p106, %p107
      %p109 = scmp.ne.s32.totalorder %s101, %s103
      %p110 = scmp.eq.s32.totalorder %s30, 1
      %p111 = por %p109, %p110
      %p112 = scmp.ne.s32.totalorder %s103, %s104
      %p113 = scmp.eq.s32.totalorder %s30, 0
      %p114 = por %p112, %p113
      %p115 = scmp.ne.s32.totalorder %s103, %s104
      %p116 = scmp.eq.s32.totalorder %s31, 1
      %p117 = por %p115, %p116
      %p119 = scmp.ne.s32.totalorder %s104, %s118
      %p120 = scmp.eq.s32.totalorder %s31, 0
      %p121 = por %p119, %p120
      %s123 = sadd.s32 %s122, 1
      %p126 = scmp.eq.s32.totalorder %s25, 1
      %p127 = scmp.ne.s32.totalorder %s122, %s124
      %p128 = scmp.eq.s32.totalorder %s25, 0
      %p129 = por %p127, %p128
      %p130 = scmp.ne.s32.totalorder %s122, %s124
      %p131 = scmp.eq.s32.totalorder %s30, 1
      %p132 = por %p130, %p131
      %p133 = scmp.ne.s32.totalorder %s124, %s125
      %p134 = scmp.eq.s32.totalorder %s30, 0
      %p135 = por %p133, %p134
      %p136 = scmp.ne.s32.totalorder %s124, %s125
      %p137 = scmp.eq.s32.totalorder %s31, 1
      %p138 = por %p136, %p137
      %p140 = scmp.ne.s32.totalorder %s125, %s139
      %p141 = scmp.eq.s32.totalorder %s31, 0
      %p142 = por %p140, %p141
      %s144 = sadd.s32 %s143, 1
      %p147 = scmp.eq.s32.totalorder %s25, 1
      %p148 = scmp.ne.s32.totalorder %s143, %s145
      %p149 = scmp.eq.s32.totalorder %s25, 0
      %p150 = por %p148, %p149
      %p151 = scmp.ne.s32.totalorder %s143, %s145
      %p152 = scmp.eq.s32.totalorder %s30, 1
      %p153 = por %p151, %p152
      %p154 = scmp.ne.s32.totalorder %s145, %s146
      %p155 = scmp.eq.s32.totalorder %s30, 0
      %p156 = por %p154, %p155
      %p157 = scmp.ne.s32.totalorder %s145, %s146
      %p158 = scmp.eq.s32.totalorder %s31, 1
      %p159 = por %p157, %p158
      %p161 = scmp.ne.s32.totalorder %s146, %s160
      %p162 = scmp.eq.s32.totalorder %s31, 0
      %p163 = por %p161, %p162
      %s165 = sadd.s32 %s164, 1
      %p168 = scmp.eq.s32.totalorder %s25, 1
      %p169 = scmp.ne.s32.totalorder %s164, %s166
      %p170 = scmp.eq.s32.totalorder %s25, 0
      %p171 = por %p169, %p170
      %p172 = scmp.ne.s32.totalorder %s164, %s166
      %p173 = scmp.eq.s32.totalorder %s30, 1
      %p174 = por %p172, %p173
      %p175 = scmp.ne.s32.totalorder %s166, %s167
      %p176 = scmp.eq.s32.totalorder %s30, 0
      %p177 = por %p175, %p176
      %p178 = scmp.ne.s32.totalorder %s166, %s167
      %p179 = scmp.eq.s32.totalorder %s31, 1
      %p180 = por %p178, %p179
      %p182 = scmp.ne.s32.totalorder %s167, %s181
      %p183 = scmp.eq.s32.totalorder %s31, 0
      %p184 = por %p182, %p183
      %s186 = sadd.s32 %s185, 1
      %p189 = scmp.eq.s32.totalorder %s25, 1
      %p190 = scmp.ne.s32.totalorder %s185, %s187
      %p191 = scmp.eq.s32.totalorder %s25, 0
      %p192 = por %p190, %p191
      %p193 = scmp.ne.s32.totalorder %s185, %s187
      %p194 = scmp.eq.s32.totalorder %s30, 1
      %p195 = por %p193, %p194
      %p196 = scmp.ne.s32.totalorder %s187, %s188
      %p197 = scmp.eq.s32.totalorder %s30, 0
      %p198 = por %p196, %p197
      %p199 = scmp.ne.s32.totalorder %s187, %s188
      %p200 = scmp.eq.s32.totalorder %s31, 1
      %p201 = por %p199, %p200
      %p203 = scmp.ne.s32.totalorder %s188, %s202
      %p204 = scmp.eq.s32.totalorder %s31, 0
      %p205 = por %p203, %p204
      %s207 = sadd.s32 %s206, 1
      %p210 = scmp.eq.s32.totalorder %s25, 1
      %p211 = scmp.ne.s32.totalorder %s206, %s208
      %p212 = scmp.eq.s32.totalorder %s25, 0
      %p213 = por %p211, %p212
      %p214 = scmp.ne.s32.totalorder %s206, %s208
      %p215 = scmp.eq.s32.totalorder %s30, 1
      %p216 = por %p214, %p215
      %p217 = scmp.ne.s32.totalorder %s208, %s209
      %p218 = scmp.eq.s32.totalorder %s30, 0
      %p219 = por %p217, %p218
      %p220 = scmp.ne.s32.totalorder %s208, %s209
      %p221 = scmp.eq.s32.totalorder %s31, 1
      %p222 = por %p220, %p221
      %p224 = scmp.ne.s32.totalorder %s209, %s223
      %p225 = scmp.eq.s32.totalorder %s31, 0
      %p226 = por %p224, %p225
      %s227 = ssub.s32 %s25, %s32
      %p228 = scmp.eq.s32.totalorder %s227, 0
      %s230 = sadd.s32 %s229, 1
      %s231 = scalar_select %p228, %s229, %s230
      %p234 = pneg %p228
      %p235 = scmp.eq.s32.totalorder %s25, 1
      %p236 = por %p234, %p235
      %p237 = scmp.ne.s32.totalorder %s229, %s232
      %p238 = scmp.eq.s32.totalorder %s25, 0
      %p239 = por %p237, %p238
      %p240 = scmp.ne.s32.totalorder %s229, %s232
      %p241 = scmp.eq.s32.totalorder %s30, 1
      %p242 = por %p240, %p241
      %p243 = scmp.ne.s32.totalorder %s232, %s233
      %p244 = scmp.eq.s32.totalorder %s30, 0
      %p245 = por %p243, %p244
      %p246 = scmp.ne.s32.totalorder %s232, %s233
      %p247 = scmp.eq.s32.totalorder %s31, 1
      %p248 = por %p246, %p247
      %p250 = scmp.ne.s32.totalorder %s233, %s249
      %p251 = scmp.eq.s32.totalorder %s31, 0
      %p252 = por %p250, %p251
      %p253 = scmp.le.s32.totalorder 1, %s25
      %p254 = scmp.lt.s32.totalorder %s25, 3
      %p255 = pnand %p253, %p254
      %p256 = pneg %p255
      // Predicated region
      $region9: #{tpu_custom_call.1} parent=5 // pred_check
        _
      $region10: #{tpu_custom_call.1} parent=5 // pred_check_branch
        %258 = sbr.rel (%p255) target = $region12
      $region11: #{tpu_custom_call.1} parent=5 // pred_region
        %s259 = ssub.s32 %s25, 1
        // Predicated region
        $region13: #{tpu_custom_call.1} parent=11 // pred_check
          %p260 = pneg %p72
        $region14: #{tpu_custom_call.1} parent=11 // pred_check_branch
          %262 = sbr.rel (%p260) target = $region16
        $region15: #{tpu_custom_call.1} parent=11 // pred_region
          %s264 = ssub.s32 1024, 1024
          %265 = vsyncadd [#allocation6], %s264
          %s266 = sshll.u32 [#allocation5], 4
          %s267 = int_to_ptr.vmem [resolvable:$true] %s266
          %272 = dma.hbm_to_vmem [thread:$0]  %s1, 1024, %s267, [#allocation6], 64, 64, 4
        $region16: #{tpu_custom_call.1} parent=11 // pred_fallthru
          _
        // Predicated region
        $region17: #{tpu_custom_call.1} parent=11 // pred_check
          %p273 = pneg %p93
        $region18: #{tpu_custom_call.1} parent=11 // pred_check_branch
          %275 = sbr.rel (%p273) target = $region20
        $region19: #{tpu_custom_call.1} parent=11 // pred_region
          %s277 = ssub.s32 1024, 1024
          %278 = vsyncadd [#allocation6], %s277
          %s279 = sshll.u32 [#allocation7], 4
          %s280 = int_to_ptr.vmem [resolvable:$true] %s279
          %285 = dma.hbm_to_vmem [thread:$0]  %s2, 1024, %s280, [#allocation6], 64, 64, 4
        $region20: #{tpu_custom_call.1} parent=11 // pred_fallthru
          _
        // Predicated region
        $region21: #{tpu_custom_call.1} parent=11 // pred_check
          %p286 = pneg %p114
        $region22: #{tpu_custom_call.1} parent=11 // pred_check_branch
          %288 = sbr.rel (%p286) target = $region24
        $region23: #{tpu_custom_call.1} parent=11 // pred_region
          %s290 = ssub.s32 1024, 1024
          %291 = vsyncadd [#allocation9], %s290
          %s292 = sshll.u32 [#allocation8], 4
          %s293 = int_to_ptr.vmem [resolvable:$true] %s292
          %298 = dma.hbm_to_vmem [thread:$0]  %s3, 1024, %s293, [#allocation9], 64, 64, 4
        $region24: #{tpu_custom_call.1} parent=11 // pred_fallthru
          _
        // Predicated region
        $region25: #{tpu_custom_call.1} parent=11 // pred_check
          %p299 = pneg %p135
        $region26: #{tpu_custom_call.1} parent=11 // pred_check_branch
          %301 = sbr.rel (%p299) target = $region28
        $region27: #{tpu_custom_call.1} parent=11 // pred_region
          %s303 = ssub.s32 64, 64
          %304 = vsyncadd [#allocation9], %s303
          %s305 = sshll.u32 [#allocation10], 4
          %s306 = int_to_ptr.vmem [resolvable:$true] %s305
          %311 = dma.hbm_to_vmem [thread:$0]  %s4, 64, %s306, [#allocation9], 16, 16, 1
        $region28: #{tpu_custom_call.1} parent=11 // pred_fallthru
          _
        // Predicated region
        $region29: #{tpu_custom_call.1} parent=11 // pred_check
          %p312 = pneg %p156
        $region30: #{tpu_custom_call.1} parent=11 // pred_check_branch
          %314 = sbr.rel (%p312) target = $region32
        $region31: #{tpu_custom_call.1} parent=11 // pred_region
          %s316 = ssub.s32 64, 64
          %317 = vsyncadd [#allocation12], %s316
          %s318 = sshll.u32 [#allocation11], 4
          %s319 = int_to_ptr.vmem [resolvable:$true] %s318
          %324 = dma.hbm_to_vmem [thread:$0]  %s5, 64, %s319, [#allocation12], 16, 16, 1
        $region32: #{tpu_custom_call.1} parent=11 // pred_fallthru
          _
        // Predicated region
        $region33: #{tpu_custom_call.1} parent=11 // pred_check
          %p325 = pneg %p177
        $region34: #{tpu_custom_call.1} parent=11 // pred_check_branch
          %327 = sbr.rel (%p325) target = $region36
        $region35: #{tpu_custom_call.1} parent=11 // pred_region
          %s329 = ssub.s32 64, 64
          %330 = vsyncadd [#allocation12], %s329
          %s331 = sshll.u32 [#allocation13], 4
          %s332 = int_to_ptr.vmem [resolvable:$true] %s331
          %337 = dma.hbm_to_vmem [thread:$0]  %s6, 64, %s332, [#allocation12], 16, 16, 1
        $region36: #{tpu_custom_call.1} parent=11 // pred_fallthru
          _
        // Predicated region
        $region37: #{tpu_custom_call.1} parent=11 // pred_check
          %p338 = pneg %p198
        $region38: #{tpu_custom_call.1} parent=11 // pred_check_branch
          %340 = sbr.rel (%p338) target = $region40
        $region39: #{tpu_custom_call.1} parent=11 // pred_region
          %s342 = ssub.s32 256, 256
          %343 = vsyncadd [#allocation15], %s342
          %s344 = sshll.u32 [#allocation14], 4
          %s345 = int_to_ptr.vmem [resolvable:$true] %s344
          %350 = dma.hbm_to_vmem [thread:$0]  %s7, 256, %s345, [#allocation15], 64, 64, 4
        $region40: #{tpu_custom_call.1} parent=11 // pred_fallthru
          _
        // Predicated region
        $region41: #{tpu_custom_call.1} parent=11 // pred_check
          %p351 = pneg %p219
        $region42: #{tpu_custom_call.1} parent=11 // pred_check_branch
          %353 = sbr.rel (%p351) target = $region44
        $region43: #{tpu_custom_call.1} parent=11 // pred_region
          %s355 = ssub.s32 16, 16
          %356 = vsyncadd [#allocation15], %s355
          %s358 = sshll.u32 [#allocation16], 4
          %s359 = int_to_ptr.vmem [resolvable:$true] %s358
          %361 = dma.hbm_to_vmem [thread:$0]  %s8, 16, %s359, [#allocation15]
        $region44: #{tpu_custom_call.1} parent=11 // pred_fallthru
          _
      $region12: #{tpu_custom_call.1} parent=5 // pred_fallthru
        _
      %p362 = scmp.lt.s32.totalorder %s25, 2
      // Predicated region
      $region45: #{tpu_custom_call.1} parent=5 // pred_check
        %p363 = pneg %p362
      $region46: #{tpu_custom_call.1} parent=5 // pred_check_branch
        %365 = sbr.rel (%p363) target = $region48
      $region47: #{tpu_custom_call.1} parent=5 // pred_region
        // Predicated region
        $region49: #{tpu_custom_call.1} parent=47 // pred_check
          %p366 = pneg %p45
        $region50: #{tpu_custom_call.1} parent=47 // pred_check_branch
          %368 = sbr.rel (%p366) target = $region52
        $region51: #{tpu_custom_call.1} parent=47 // pred_region
          %s369 = sand.u32 %s35, 1
          %s370 = scalar_lea.sflag [#allocation3], %s369
          %s371 = sand.u32 %s35, 1
          %s372 = smul.addr %s371, 8
          %s373 = scalar_lea.vmem [#allocation2], %s372
          %s375 = ssub.s32 128, 128
          %376 = vsyncadd %s370, %s375
          %s377 = smul.addr %s25, 128
          %s378 = scalar_lea.hbm %s0, %s377
          %s380 = sshll.u32 %s373, 4
          %s381 = int_to_ptr.vmem [resolvable:$true] %s380
          %383 = dma.hbm_to_vmem [thread:$0]  %s378, 128, %s381, %s370
        $region52: #{tpu_custom_call.1} parent=47 // pred_fallthru
          _
      $region48: #{tpu_custom_call.1} parent=5 // pred_fallthru
        _
      %p384 = scmp.le.s32.totalorder 1, %s25
      %p385 = scmp.lt.s32.totalorder %s25, 3
      %p386 = pnand %p384, %p385
      %p387 = pneg %p386
      // Predicated region
      $region53: #{tpu_custom_call.1} parent=5 // pred_check
        _
      $region54: #{tpu_custom_call.1} parent=5 // pred_check_branch
        %389 = sbr.rel (%p386) target = $region56
      $region55: #{tpu_custom_call.1} parent=5 // pred_region
        %s390 = ssub.s32 %s25, 1
        %s391 = sand.u32 %s38, 1
        %s392 = scalar_lea.sflag [#allocation3], %s391
        %s393 = sand.u32 %s38, 1
        %s394 = smul.addr %s393, 8
        %s395 = scalar_lea.vmem [#allocation2], %s394
        // Predicated region
        $region57: #{tpu_custom_call.1} parent=55 // pred_check
          %p396 = pneg %p51
        $region58: #{tpu_custom_call.1} parent=55 // pred_check_branch
          %398 = sbr.rel (%p396) target = $region60
        $region59: #{tpu_custom_call.1} parent=55 // pred_region
          %399 = dma.done %s392, 128
        $region60: #{tpu_custom_call.1} parent=55 // pred_fallthru
          _
        // Predicated region
        $region61: #{tpu_custom_call.1} parent=55 // pred_check
          %p400 = pneg %p72
        $region62: #{tpu_custom_call.1} parent=55 // pred_check_branch
          %402 = sbr.rel (%p400) target = $region64
        $region63: #{tpu_custom_call.1} parent=55 // pred_region
          %403 = dma.done [#allocation6], 1024
        $region64: #{tpu_custom_call.1} parent=55 // pred_fallthru
          _
        // Predicated region
        $region65: #{tpu_custom_call.1} parent=55 // pred_check
          %p404 = pneg %p93
        $region66: #{tpu_custom_call.1} parent=55 // pred_check_branch
          %406 = sbr.rel (%p404) target = $region68
        $region67: #{tpu_custom_call.1} parent=55 // pred_region
          %407 = dma.done [#allocation6], 1024
        $region68: #{tpu_custom_call.1} parent=55 // pred_fallthru
          _
        // Predicated region
        $region69: #{tpu_custom_call.1} parent=55 // pred_check
          %p408 = pneg %p114
        $region70: #{tpu_custom_call.1} parent=55 // pred_check_branch
          %410 = sbr.rel (%p408) target = $region72
        $region71: #{tpu_custom_call.1} parent=55 // pred_region
          %411 = dma.done [#allocation9], 1024
        $region72: #{tpu_custom_call.1} parent=55 // pred_fallthru
          _
        // Predicated region
        $region73: #{tpu_custom_call.1} parent=55 // pred_check
          %p412 = pneg %p135
        $region74: #{tpu_custom_call.1} parent=55 // pred_check_branch
          %414 = sbr.rel (%p412) target = $region76
        $region75: #{tpu_custom_call.1} parent=55 // pred_region
          %415 = dma.done [#allocation9], 64
        $region76: #{tpu_custom_call.1} parent=55 // pred_fallthru
          _
        // Predicated region
        $region77: #{tpu_custom_call.1} parent=55 // pred_check
          %p416 = pneg %p156
        $region78: #{tpu_custom_call.1} parent=55 // pred_check_branch
          %418 = sbr.rel (%p416) target = $region80
        $region79: #{tpu_custom_call.1} parent=55 // pred_region
          %419 = dma.done [#allocation12], 64
        $region80: #{tpu_custom_call.1} parent=55 // pred_fallthru
          _
        // Predicated region
        $region81: #{tpu_custom_call.1} parent=55 // pred_check
          %p420 = pneg %p177
        $region82: #{tpu_custom_call.1} parent=55 // pred_check_branch
          %422 = sbr.rel (%p420) target = $region84
        $region83: #{tpu_custom_call.1} parent=55 // pred_region
          %423 = dma.done [#allocation12], 64
        $region84: #{tpu_custom_call.1} parent=55 // pred_fallthru
          _
        // Predicated region
        $region85: #{tpu_custom_call.1} parent=55 // pred_check
          %p424 = pneg %p198
        $region86: #{tpu_custom_call.1} parent=55 // pred_check_branch
          %426 = sbr.rel (%p424) target = $region88
        $region87: #{tpu_custom_call.1} parent=55 // pred_region
          %427 = dma.done [#allocation15], 256
        $region88: #{tpu_custom_call.1} parent=55 // pred_fallthru
          _
        // Predicated region
        $region89: #{tpu_custom_call.1} parent=55 // pred_check
          %p428 = pneg %p219
        $region90: #{tpu_custom_call.1} parent=55 // pred_check_branch
          %430 = sbr.rel (%p428) target = $region92
        $region91: #{tpu_custom_call.1} parent=55 // pred_region
          %431 = dma.done [#allocation15], 16
        $region92: #{tpu_custom_call.1} parent=55 // pred_fallthru
          _
        %s432 = sand.u32 %s38, 1
        %s433 = scalar_lea.sflag [#allocation3], %s432
        %s434 = sand.u32 %s38, 1
        %s435 = smul.addr %s434, 8
        %s436 = scalar_lea.vmem [#allocation2], %s435
        %p437 = pneg %p51
        %p438 = pneg %p48
        %p439 = pneg %p72
        %p440 = pneg %p69
        %p441 = pneg %p93
        %p442 = pneg %p90
        %p443 = pneg %p114
        %p444 = pneg %p111
        %p445 = pneg %p135
        %p446 = pneg %p132
        %p447 = pneg %p156
        %p448 = pneg %p153
        %p449 = pneg %p177
        %p450 = pneg %p174
        %p451 = pneg %p198
        %p452 = pneg %p195
        %p453 = pneg %p219
        %p454 = pneg %p216
        %p455 = pneg %p245
        %p456 = pneg %p242
        %s457 = sand.u32 %s232, 1
        %s458 = scalar_lea.sflag [#allocation4], %s457
        %s459 = sand.u32 %s232, 1
        %s460 = smul.addr %s459, 8
        %s461 = scalar_lea.vmem [#allocation17], %s460
        %v463 = vld [vmem:[%s395] sm:$0xff]
        %v464 = vpack.c.bf16 %v463, %v463
        %v465 = vld [vmem:[#allocation5] sm:$0xf]
        %v466 = vld [vmem:[#allocation5 + $0x4] sm:$0xf]
        %v467 = vld [vmem:[#allocation5 + $0x8] sm:$0xf]
        %v468 = vld [vmem:[#allocation5 + $0xc] sm:$0xf]
        %v469 = vld [vmem:[#allocation10] sm:$0x1]
        %v471 = vlaneseq
        %v472 = vshrl.u32 %v471, 7
        %v473 = vsub.s32 0, %v472
        %v474 = vrot.slane %v469, %v473
        %v480 = vunpack.c.l.b16 %v465
        %v481 = vunpack.c.l.b16 %v466
        %v482 = vunpack.c.l.b16 %v467
        %v483 = vunpack.c.l.b16 %v468
        %v484 = vpack.c.b16 %v481, %v480
        %v485 = vpack.c.b16 %v483, %v482
        %vm488 = vcmask 261120
        %v490 = vsel %vm488, %v464, 0
        %492 = vmatprep.subr.bf16.mxu0 0
        %493 = vmatpush1.bf16.msra.mxu0 %v484
        %494 = vmatprep.subr.bf16.mxu0 0
        %495 = vmatpush1.bf16.msra.mxu0 %v485
        %496 = vmatprep.subr.bf16.mxu0 0
        %497 = vmatpush1.bf16.msra.mxu0 0
        %498 = vmatprep.subr.bf16.mxu0 0
        %499 = vmatpush1.bf16.msra.mxu0 0
        %500 = vmatprep.subr.bf16.mxu0 0
        %501 = vmatpush1.bf16.msra.mxu0 0
        %502 = vmatprep.subr.bf16.mxu0 0
        %503 = vmatpush1.bf16.msra.mxu0 0
        %504 = vmatprep.subr.bf16.mxu0 0
        %505 = vmatpush1.bf16.msra.mxu0 0
        %506 = vmatprep.subr.bf16.mxu0 0
        %507 = vmatpush1.bf16.msra.mxu0 0
        %508 = vmatprep.subr.bf16.mxu0 0
        %509 = vmatpush1.bf16.msra.mxu0 0
        %510 = vmatprep.subr.bf16.mxu0 0
        %511 = vmatpush1.bf16.msra.mxu0 0
        %512 = vmatprep.subr.bf16.mxu0 0
        %513 = vmatpush1.bf16.msra.mxu0 0
        %514 = vmatprep.subr.bf16.mxu0 0
        %515 = vmatpush1.bf16.msra.mxu0 0
        %516 = vmatprep.subr.bf16.mxu0 0
        %517 = vmatpush1.bf16.msra.mxu0 0
        %518 = vmatprep.subr.bf16.mxu0 0
        %519 = vmatpush1.bf16.msra.mxu0 0
        %520 = vmatprep.subr.bf16.mxu0 0
        %521 = vmatpush1.bf16.msra.mxu0 0
        %522 = vmatprep.subr.bf16.mxu0 0
        %523 = vmatpush1.bf16.msra.mxu0 0
        %524 = vmatprep.mubr.bf16.mxu0 0
        %525 = vmatmul.mubr.bf16.gmra.mrb[0].mxu0 %v490
        %v526 = vpop.f32.mrb[0].mxu0
        %v527 = vadd.f32 %v474, %v526
        %v528 = vpop.f32.mrb[0].mxu0
        %v529 = vpop.f32.mrb[0].mxu0
        %v530 = vpop.f32.mrb[0].mxu0
        %531 = vdwg.mxu0
        %v532 = vld [vmem:[#allocation7] sm:$0xf]
        %v533 = vld [vmem:[#allocation7 + $0x4] sm:$0xf]
        %v534 = vld [vmem:[#allocation7 + $0x8] sm:$0xf]
        %v535 = vld [vmem:[#allocation7 + $0xc] sm:$0xf]
        %v536 = vld [vmem:[#allocation11] sm:$0x1]
        %v538 = vlaneseq
        %v539 = vshrl.u32 %v538, 7
        %v540 = vsub.s32 0, %v539
        %v541 = vrot.slane %v536, %v540
        %v547 = vunpack.c.l.b16 %v532
        %v548 = vunpack.c.l.b16 %v533
        %v549 = vunpack.c.l.b16 %v534
        %v550 = vunpack.c.l.b16 %v535
        %v551 = vpack.c.b16 %v548, %v547
        %v552 = vpack.c.b16 %v550, %v549
        %555 = vmatprep.subr.bf16.mxu0 0
        %556 = vmatpush1.bf16.msra.mxu0 %v551
        %557 = vmatprep.subr.bf16.mxu0 0
        %558 = vmatpush1.bf16.msra.mxu0 %v552
        %559 = vmatprep.subr.bf16.mxu0 0
        %560 = vmatpush1.bf16.msra.mxu0 0
        %561 = vmatprep.subr.bf16.mxu0 0
        %562 = vmatpush1.bf16.msra.mxu0 0
        %563 = vmatprep.subr.bf16.mxu0 0
        %564 = vmatpush1.bf16.msra.mxu0 0
        %565 = vmatprep.subr.bf16.mxu0 0
        %566 = vmatpush1.bf16.msra.mxu0 0
        %567 = vmatprep.subr.bf16.mxu0 0
        %568 = vmatpush1.bf16.msra.mxu0 0
        %569 = vmatprep.subr.bf16.mxu0 0
        %570 = vmatpush1.bf16.msra.mxu0 0
        %571 = vmatprep.subr.bf16.mxu0 0
        %572 = vmatpush1.bf16.msra.mxu0 0
        %573 = vmatprep.subr.bf16.mxu0 0
        %574 = vmatpush1.bf16.msra.mxu0 0
        %575 = vmatprep.subr.bf16.mxu0 0
        %576 = vmatpush1.bf16.msra.mxu0 0
        %577 = vmatprep.subr.bf16.mxu0 0
        %578 = vmatpush1.bf16.msra.mxu0 0
        %579 = vmatprep.subr.bf16.mxu0 0
        %580 = vmatpush1.bf16.msra.mxu0 0
        %581 = vmatprep.subr.bf16.mxu0 0
        %582 = vmatpush1.bf16.msra.mxu0 0
        %583 = vmatprep.subr.bf16.mxu0 0
        %584 = vmatpush1.bf16.msra.mxu0 0
        %585 = vmatprep.subr.bf16.mxu0 0
        %586 = vmatpush1.bf16.msra.mxu0 0
        %587 = vmatprep.mubr.bf16.mxu0 0
        %588 = vmatmul.mubr.bf16.gmra.mrb[0].mxu0 %v490
        %v589 = vpop.f32.mrb[0].mxu0
        %v590 = vadd.f32 %v541, %v589
        %v591 = vpop.f32.mrb[0].mxu0
        %v592 = vpop.f32.mrb[0].mxu0
        %v593 = vpop.f32.mrb[0].mxu0
        %594 = vdwg.mxu0
        %v595 = vld [vmem:[#allocation8] sm:$0xf]
        %v596 = vld [vmem:[#allocation8 + $0x4] sm:$0xf]
        %v597 = vld [vmem:[#allocation8 + $0x8] sm:$0xf]
        %v598 = vld [vmem:[#allocation8 + $0xc] sm:$0xf]
        %v599 = vld [vmem:[#allocation13] sm:$0x1]
        %v601 = vlaneseq
        %v602 = vshrl.u32 %v601, 7
        %v603 = vsub.s32 0, %v602
        %v604 = vrot.slane %v599, %v603
        %v610 = vunpack.c.l.b16 %v595
        %v611 = vunpack.c.l.b16 %v596
        %v612 = vunpack.c.l.b16 %v597
        %v613 = vunpack.c.l.b16 %v598
        %v614 = vpack.c.b16 %v611, %v610
        %v615 = vpack.c.b16 %v613, %v612
        %618 = vmatprep.subr.bf16.mxu0 0
        %619 = vmatpush1.bf16.msra.mxu0 %v614
        %620 = vmatprep.subr.bf16.mxu0 0
        %621 = vmatpush1.bf16.msra.mxu0 %v615
        %622 = vmatprep.subr.bf16.mxu0 0
        %623 = vmatpush1.bf16.msra.mxu0 0
        %624 = vmatprep.subr.bf16.mxu0 0
        %625 = vmatpush1.bf16.msra.mxu0 0
        %626 = vmatprep.subr.bf16.mxu0 0
        %627 = vmatpush1.bf16.msra.mxu0 0
        %628 = vmatprep.subr.bf16.mxu0 0
        %629 = vmatpush1.bf16.msra.mxu0 0
        %630 = vmatprep.subr.bf16.mxu0 0
        %631 = vmatpush1.bf16.msra.mxu0 0
        %632 = vmatprep.subr.bf16.mxu0 0
        %633 = vmatpush1.bf16.msra.mxu0 0
        %634 = vmatprep.subr.bf16.mxu0 0
        %635 = vmatpush1.bf16.msra.mxu0 0
        %636 = vmatprep.subr.bf16.mxu0 0
        %637 = vmatpush1.bf16.msra.mxu0 0
        %638 = vmatprep.subr.bf16.mxu0 0
        %639 = vmatpush1.bf16.msra.mxu0 0
        %640 = vmatprep.subr.bf16.mxu0 0
        %641 = vmatpush1.bf16.msra.mxu0 0
        %642 = vmatprep.subr.bf16.mxu0 0
        %643 = vmatpush1.bf16.msra.mxu0 0
        %644 = vmatprep.subr.bf16.mxu0 0
        %645 = vmatpush1.bf16.msra.mxu0 0
        %646 = vmatprep.subr.bf16.mxu0 0
        %647 = vmatpush1.bf16.msra.mxu0 0
        %648 = vmatprep.subr.bf16.mxu0 0
        %649 = vmatpush1.bf16.msra.mxu0 0
        %650 = vmatprep.mubr.bf16.mxu0 0
        %651 = vmatmul.mubr.bf16.gmra.mrb[0].mxu0 %v490
        %v652 = vpop.f32.mrb[0].mxu0
        %v653 = vadd.f32 %v604, %v652
        %v654 = vpop.f32.mrb[0].mxu0
        %v655 = vpop.f32.mrb[0].mxu0
        %v656 = vpop.f32.mrb[0].mxu0
        %657 = vdwg.mxu0
        %v658 = vpack.c.bf16 %v527, %v527
        %v659 = vpack.c.bf16 %v590, %v590
        %v660 = vpack.c.bf16 %v653, %v653
        %vm661 = vcmask 64512
        %v663 = vsel %vm661, %v658, 0
        %v666 = vsel %vm661, %v659, 0
        %668 = vmatprep.subr.bf16.mxu0 0
        %669 = vmatpush1.bf16.xpose.msra.mxu0 %v666
        %670 = vmatprep.subr.bf16.mxu0 0
        %671 = vmatpush1.bf16.xpose.msra.mxu0 0
        %672 = vmatprep.subr.bf16.mxu0 0
        %673 = vmatpush1.bf16.xpose.msra.mxu0 0
        %674 = vmatprep.subr.bf16.mxu0 0
        %675 = vmatpush1.bf16.xpose.msra.mxu0 0
        %676 = vmatprep.subr.bf16.mxu0 0
        %677 = vmatpush1.bf16.xpose.msra.mxu0 0
        %678 = vmatprep.subr.bf16.mxu0 0
        %679 = vmatpush1.bf16.xpose.msra.mxu0 0
        %680 = vmatprep.subr.bf16.mxu0 0
        %681 = vmatpush1.bf16.xpose.msra.mxu0 0
        %682 = vmatprep.subr.bf16.mxu0 0
        %683 = vmatpush1.bf16.xpose.msra.mxu0 0
        %684 = vmatprep.subr.bf16.mxu0 0
        %685 = vmatpush1.bf16.xpose.msra.mxu0 0
        %686 = vmatprep.subr.bf16.mxu0 0
        %687 = vmatpush1.bf16.xpose.msra.mxu0 0
        %688 = vmatprep.subr.bf16.mxu0 0
        %689 = vmatpush1.bf16.xpose.msra.mxu0 0
        %690 = vmatprep.subr.bf16.mxu0 0
        %691 = vmatpush1.bf16.xpose.msra.mxu0 0
        %692 = vmatprep.subr.bf16.mxu0 0
        %693 = vmatpush1.bf16.xpose.msra.mxu0 0
        %694 = vmatprep.subr.bf16.mxu0 0
        %695 = vmatpush1.bf16.xpose.msra.mxu0 0
        %696 = vmatprep.subr.bf16.mxu0 0
        %697 = vmatpush1.bf16.xpose.msra.mxu0 0
        %698 = vmatprep.subr.bf16.mxu0 0
        %699 = vmatpush1.bf16.xpose.msra.mxu0 0
        %700 = vmatprep.mubr.bf16.mxu0 0
        %701 = vmatmul.mubr.bf16.gmra.mrb[0].mxu0 %v663
        %v702 = vpop.f32.mrb[0].mxu0
        %v703 = vadd.f32 0.0, %v702
        %v704 = vpop.f32.mrb[0].mxu0
        %v705 = vpop.f32.mrb[0].mxu0
        %v706 = vpop.f32.mrb[0].mxu0
        %707 = vdwg.mxu0
        %v708 = vsel %vm661, %v703, -inf
        %709 = vmax.xlane.f32.xlu0 %v708
        %v710 = vpop.xlane.xlu0 %709
        %v711 = vsub.f32 %v703, %v710
        %v712 = vmul.f32 %v711, 1.442695
        %v713 = vpow.pop %v712
        %v714 = vsel %vm661, %v713, 0.0
        %715 = vadd.xlane.f32.xlu0 %v714
        %v716 = vpop.xlane.xlu0 %715
        %v717 = vrcp.pop %v716
        %v718 = vpack.c.bf16 %v713, %v713
        %v720 = vsel %vm661, %v718, 0
        %vm722 = vcmask 1043456
        %v724 = vsel %vm722, %v660, 0
        %726 = vmatprep.subr.bf16.mxu0 0
        %727 = vmatpush1.bf16.msra.mxu0 %v724
        %728 = vmatprep.subr.bf16.mxu0 0
        %729 = vmatpush1.bf16.msra.mxu0 0
        %730 = vmatprep.subr.bf16.mxu0 0
        %731 = vmatpush1.bf16.msra.mxu0 0
        %732 = vmatprep.subr.bf16.mxu0 0
        %733 = vmatpush1.bf16.msra.mxu0 0
        %734 = vmatprep.subr.bf16.mxu0 0
        %735 = vmatpush1.bf16.msra.mxu0 0
        %736 = vmatprep.subr.bf16.mxu0 0
        %737 = vmatpush1.bf16.msra.mxu0 0
        %738 = vmatprep.subr.bf16.mxu0 0
        %739 = vmatpush1.bf16.msra.mxu0 0
        %740 = vmatprep.subr.bf16.mxu0 0
        %741 = vmatpush1.bf16.msra.mxu0 0
        %742 = vmatprep.subr.bf16.mxu0 0
        %743 = vmatpush1.bf16.msra.mxu0 0
        %744 = vmatprep.subr.bf16.mxu0 0
        %745 = vmatpush1.bf16.msra.mxu0 0
        %746 = vmatprep.subr.bf16.mxu0 0
        %747 = vmatpush1.bf16.msra.mxu0 0
        %748 = vmatprep.subr.bf16.mxu0 0
        %749 = vmatpush1.bf16.msra.mxu0 0
        %750 = vmatprep.subr.bf16.mxu0 0
        %751 = vmatpush1.bf16.msra.mxu0 0
        %752 = vmatprep.subr.bf16.mxu0 0
        %753 = vmatpush1.bf16.msra.mxu0 0
        %754 = vmatprep.subr.bf16.mxu0 0
        %755 = vmatpush1.bf16.msra.mxu0 0
        %756 = vmatprep.subr.bf16.mxu0 0
        %757 = vmatpush1.bf16.msra.mxu0 0
        %758 = vmatprep.mubr.bf16.mxu0 0
        %759 = vmatmul.mubr.bf16.gmra.mrb[0].mxu0 %v720
        %v760 = vpop.f32.mrb[0].mxu0
        %v761 = vadd.f32 0.0, %v760
        %v762 = vpop.f32.mrb[0].mxu0
        %v763 = vpop.f32.mrb[0].mxu0
        %v764 = vpop.f32.mrb[0].mxu0
        %765 = vdwg.mxu0
        %v766 = vmul.f32 %v761, %v717
        %v767 = vpack.c.bf16 %v766, %v766
        %v768 = vld [vmem:[#allocation14] sm:$0xf]
        %s769 = scalar_lea.vmem [#allocation5], 16
        %v770 = vld [vmem:[%s769] sm:$0xf]
        %v771 = vld [vmem:[%s769 + $0x4] sm:$0xf]
        %v772 = vld [vmem:[%s769 + $0x8] sm:$0xf]
        %v773 = vld [vmem:[%s769 + $0xc] sm:$0xf]
        %s774 = scalar_lea.vmem [#allocation10], 1
        %v775 = vld [vmem:[%s774] sm:$0x1]
        %v777 = vlaneseq
        %v778 = vshrl.u32 %v777, 7
        %v779 = vsub.s32 0, %v778
        %v780 = vrot.slane %v775, %v779
        %v786 = vunpack.c.l.b16 %v770
        %v787 = vunpack.c.l.b16 %v771
        %v788 = vunpack.c.l.b16 %v772
        %v789 = vunpack.c.l.b16 %v773
        %v790 = vpack.c.b16 %v787, %v786
        %v791 = vpack.c.b16 %v789, %v788
        %794 = vmatprep.subr.bf16.mxu0 0
        %795 = vmatpush1.bf16.msra.mxu0 %v790
        %796 = vmatprep.subr.bf16.mxu0 0
        %797 = vmatpush1.bf16.msra.mxu0 %v791
        %798 = vmatprep.subr.bf16.mxu0 0
        %799 = vmatpush1.bf16.msra.mxu0 0
        %800 = vmatprep.subr.bf16.mxu0 0
        %801 = vmatpush1.bf16.msra.mxu0 0
        %802 = vmatprep.subr.bf16.mxu0 0
        %803 = vmatpush1.bf16.msra.mxu0 0
        %804 = vmatprep.subr.bf16.mxu0 0
        %805 = vmatpush1.bf16.msra.mxu0 0
        %806 = vmatprep.subr.bf16.mxu0 0
        %807 = vmatpush1.bf16.msra.mxu0 0
        %808 = vmatprep.subr.bf16.mxu0 0
        %809 = vmatpush1.bf16.msra.mxu0 0
        %810 = vmatprep.subr.bf16.mxu0 0
        %811 = vmatpush1.bf16.msra.mxu0 0
        %812 = vmatprep.subr.bf16.mxu0 0
        %813 = vmatpush1.bf16.msra.mxu0 0
        %814 = vmatprep.subr.bf16.mxu0 0
        %815 = vmatpush1.bf16.msra.mxu0 0
        %816 = vmatprep.subr.bf16.mxu0 0
        %817 = vmatpush1.bf16.msra.mxu0 0
        %818 = vmatprep.subr.bf16.mxu0 0
        %819 = vmatpush1.bf16.msra.mxu0 0
        %820 = vmatprep.subr.bf16.mxu0 0
        %821 = vmatpush1.bf16.msra.mxu0 0
        %822 = vmatprep.subr.bf16.mxu0 0
        %823 = vmatpush1.bf16.msra.mxu0 0
        %824 = vmatprep.subr.bf16.mxu0 0
        %825 = vmatpush1.bf16.msra.mxu0 0
        %826 = vmatprep.mubr.bf16.mxu0 0
        %827 = vmatmul.mubr.bf16.gmra.mrb[0].mxu0 %v490
        %v828 = vpop.f32.mrb[0].mxu0
        %v829 = vadd.f32 %v780, %v828
        %v830 = vpop.f32.mrb[0].mxu0
        %v831 = vpop.f32.mrb[0].mxu0
        %v832 = vpop.f32.mrb[0].mxu0
        %833 = vdwg.mxu0
        %s834 = scalar_lea.vmem [#allocation7], 16
        %v835 = vld [vmem:[%s834] sm:$0xf]
        %v836 = vld [vmem:[%s834 + $0x4] sm:$0xf]
        %v837 = vld [vmem:[%s834 + $0x8] sm:$0xf]
        %v838 = vld [vmem:[%s834 + $0xc] sm:$0xf]
        %s839 = scalar_lea.vmem [#allocation11], 1
        %v840 = vld [vmem:[%s839] sm:$0x1]
        %v842 = vlaneseq
        %v843 = vshrl.u32 %v842, 7
        %v844 = vsub.s32 0, %v843
        %v845 = vrot.slane %v840, %v844
        %v851 = vunpack.c.l.b16 %v835
        %v852 = vunpack.c.l.b16 %v836
        %v853 = vunpack.c.l.b16 %v837
        %v854 = vunpack.c.l.b16 %v838
        %v855 = vpack.c.b16 %v852, %v851
        %v856 = vpack.c.b16 %v854, %v853
        %859 = vmatprep.subr.bf16.mxu0 0
        %860 = vmatpush1.bf16.msra.mxu0 %v855
        %861 = vmatprep.subr.bf16.mxu0 0
        %862 = vmatpush1.bf16.msra.mxu0 %v856
        %863 = vmatprep.subr.bf16.mxu0 0
        %864 = vmatpush1.bf16.msra.mxu0 0
        %865 = vmatprep.subr.bf16.mxu0 0
        %866 = vmatpush1.bf16.msra.mxu0 0
        %867 = vmatprep.subr.bf16.mxu0 0
        %868 = vmatpush1.bf16.msra.mxu0 0
        %869 = vmatprep.subr.bf16.mxu0 0
        %870 = vmatpush1.bf16.msra.mxu0 0
        %871 = vmatprep.subr.bf16.mxu0 0
        %872 = vmatpush1.bf16.msra.mxu0 0
        %873 = vmatprep.subr.bf16.mxu0 0
        %874 = vmatpush1.bf16.msra.mxu0 0
        %875 = vmatprep.subr.bf16.mxu0 0
        %876 = vmatpush1.bf16.msra.mxu0 0
        %877 = vmatprep.subr.bf16.mxu0 0
        %878 = vmatpush1.bf16.msra.mxu0 0
        %879 = vmatprep.subr.bf16.mxu0 0
        %880 = vmatpush1.bf16.msra.mxu0 0
        %881 = vmatprep.subr.bf16.mxu0 0
        %882 = vmatpush1.bf16.msra.mxu0 0
        %883 = vmatprep.subr.bf16.mxu0 0
        %884 = vmatpush1.bf16.msra.mxu0 0
        %885 = vmatprep.subr.bf16.mxu0 0
        %886 = vmatpush1.bf16.msra.mxu0 0
        %887 = vmatprep.subr.bf16.mxu0 0
        %888 = vmatpush1.bf16.msra.mxu0 0
        %889 = vmatprep.subr.bf16.mxu0 0
        %890 = vmatpush1.bf16.msra.mxu0 0
        %891 = vmatprep.mubr.bf16.mxu0 0
        %892 = vmatmul.mubr.bf16.gmra.mrb[0].mxu0 %v490
        %v893 = vpop.f32.mrb[0].mxu0
        %v894 = vadd.f32 %v845, %v893
        %v895 = vpop.f32.mrb[0].mxu0
        %v896 = vpop.f32.mrb[0].mxu0
        %v897 = vpop.f32.mrb[0].mxu0
        %898 = vdwg.mxu0
        %s899 = scalar_lea.vmem [#allocation8], 16
        %v900 = vld [vmem:[%s899] sm:$0xf]
        %v901 = vld [vmem:[%s899 + $0x4] sm:$0xf]
        %v902 = vld [vmem:[%s899 + $0x8] sm:$0xf]
        %v903 = vld [vmem:[%s899 + $0xc] sm:$0xf]
        %s904 = scalar_lea.vmem [#allocation13], 1
        %v905 = vld [vmem:[%s904] sm:$0x1]
        %v907 = vlaneseq
        %v908 = vshrl.u32 %v907, 7
        %v909 = vsub.s32 0, %v908
        %v910 = vrot.slane %v905, %v909
        %v916 = vunpack.c.l.b16 %v900
        %v917 = vunpack.c.l.b16 %v901
        %v918 = vunpack.c.l.b16 %v902
        %v919 = vunpack.c.l.b16 %v903
        %v920 = vpack.c.b16 %v917, %v916
        %v921 = vpack.c.b16 %v919, %v918
        %924 = vmatprep.subr.bf16.mxu0 0
        %925 = vmatpush1.bf16.msra.mxu0 %v920
        %926 = vmatprep.subr.bf16.mxu0 0
        %927 = vmatpush1.bf16.msra.mxu0 %v921
        %928 = vmatprep.subr.bf16.mxu0 0
        %929 = vmatpush1.bf16.msra.mxu0 0
        %930 = vmatprep.subr.bf16.mxu0 0
        %931 = vmatpush1.bf16.msra.mxu0 0
        %932 = vmatprep.subr.bf16.mxu0 0
        %933 = vmatpush1.bf16.msra.mxu0 0
        %934 = vmatprep.subr.bf16.mxu0 0
        %935 = vmatpush1.bf16.msra.mxu0 0
        %936 = vmatprep.subr.bf16.mxu0 0
        %937 = vmatpush1.bf16.msra.mxu0 0
        %938 = vmatprep.subr.bf16.mxu0 0
        %939 = vmatpush1.bf16.msra.mxu0 0
        %940 = vmatprep.subr.bf16.mxu0 0
        %941 = vmatpush1.bf16.msra.mxu0 0
        %942 = vmatprep.subr.bf16.mxu0 0
        %943 = vmatpush1.bf16.msra.mxu0 0
        %944 = vmatprep.subr.bf16.mxu0 0
        %945 = vmatpush1.bf16.msra.mxu0 0
        %946 = vmatprep.subr.bf16.mxu0 0
        %947 = vmatpush1.bf16.msra.mxu0 0
        %948 = vmatprep.subr.bf16.mxu0 0
        %949 = vmatpush1.bf16.msra.mxu0 0
        %950 = vmatprep.subr.bf16.mxu0 0
        %951 = vmatpush1.bf16.msra.mxu0 0
        %952 = vmatprep.subr.bf16.mxu0 0
        %953 = vmatpush1.bf16.msra.mxu0 0
        %954 = vmatprep.subr.bf16.mxu0 0
        %955 = vmatpush1.bf16.msra.mxu0 0
        %956 = vmatprep.mubr.bf16.mxu0 0
        %957 = vmatmul.mubr.bf16.gmra.mrb[0].mxu0 %v490
        %v958 = vpop.f32.mrb[0].mxu0
        %v959 = vadd.f32 %v910, %v958
        %v960 = vpop.f32.mrb[0].mxu0
        %v961 = vpop.f32.mrb[0].mxu0
        %v962 = vpop.f32.mrb[0].mxu0
        %963 = vdwg.mxu0
        %v964 = vpack.c.bf16 %v829, %v829
        %v965 = vpack.c.bf16 %v894, %v894
        %v966 = vpack.c.bf16 %v959, %v959
        %v968 = vsel %vm661, %v964, 0
        %v971 = vsel %vm661, %v965, 0
        %973 = vmatprep.subr.bf16.mxu0 0
        %974 = vmatpush1.bf16.xpose.msra.mxu0 %v971
        %975 = vmatprep.subr.bf16.mxu0 0
        %976 = vmatpush1.bf16.xpose.msra.mxu0 0
        %977 = vmatprep.subr.bf16.mxu0 0
        %978 = vmatpush1.bf16.xpose.msra.mxu0 0
        %979 = vmatprep.subr.bf16.mxu0 0
        %980 = vmatpush1.bf16.xpose.msra.mxu0 0
        %981 = vmatprep.subr.bf16.mxu0 0
        %982 = vmatpush1.bf16.xpose.msra.mxu0 0
        %983 = vmatprep.subr.bf16.mxu0 0
        %984 = vmatpush1.bf16.xpose.msra.mxu0 0
        %985 = vmatprep.subr.bf16.mxu0 0
        %986 = vmatpush1.bf16.xpose.msra.mxu0 0
        %987 = vmatprep.subr.bf16.mxu0 0
        %988 = vmatpush1.bf16.xpose.msra.mxu0 0
        %989 = vmatprep.subr.bf16.mxu0 0
        %990 = vmatpush1.bf16.xpose.msra.mxu0 0
        %991 = vmatprep.subr.bf16.mxu0 0
        %992 = vmatpush1.bf16.xpose.msra.mxu0 0
        %993 = vmatprep.subr.bf16.mxu0 0
        %994 = vmatpush1.bf16.xpose.msra.mxu0 0
        %995 = vmatprep.subr.bf16.mxu0 0
        %996 = vmatpush1.bf16.xpose.msra.mxu0 0
        %997 = vmatprep.subr.bf16.mxu0 0
        %998 = vmatpush1.bf16.xpose.msra.mxu0 0
        %999 = vmatprep.subr.bf16.mxu0 0
        %1000 = vmatpush1.bf16.xpose.msra.mxu0 0
        %1001 = vmatprep.subr.bf16.mxu0 0
        %1002 = vmatpush1.bf16.xpose.msra.mxu0 0
        %1003 = vmatprep.subr.bf16.mxu0 0
        %1004 = vmatpush1.bf16.xpose.msra.mxu0 0
        %1005 = vmatprep.mubr.bf16.mxu0 0
        %1006 = vmatmul.mubr.bf16.gmra.mrb[0].mxu0 %v968
        %v1007 = vpop.f32.mrb[0].mxu0
        %v1008 = vadd.f32 0.0, %v1007
        %v1009 = vpop.f32.mrb[0].mxu0
        %v1010 = vpop.f32.mrb[0].mxu0
        %v1011 = vpop.f32.mrb[0].mxu0
        %1012 = vdwg.mxu0
        %v1013 = vsel %vm661, %v1008, -inf
        %1014 = vmax.xlane.f32.xlu0 %v1013
        %v1015 = vpop.xlane.xlu0 %1014
        %v1016 = vsub.f32 %v1008, %v1015
        %v1017 = vmul.f32 %v1016, 1.442695
        %v1018 = vpow.pop %v1017
        %v1019 = vsel %vm661, %v1018, 0.0
        %1020 = vadd.xlane.f32.xlu0 %v1019
        %v1021 = vpop.xlane.xlu0 %1020
        %v1022 = vrcp.pop %v1021
        %v1023 = vpack.c.bf16 %v1018, %v1018
        %v1025 = vsel %vm661, %v1023, 0
        %v1028 = vsel %vm722, %v966, 0
        %1030 = vmatprep.subr.bf16.mxu0 0
        %1031 = vmatpush1.bf16.msra.mxu0 %v1028
        %1032 = vmatprep.subr.bf16.mxu0 0
        %1033 = vmatpush1.bf16.msra.mxu0 0
        %1034 = vmatprep.subr.bf16.mxu0 0
        %1035 = vmatpush1.bf16.msra.mxu0 0
        %1036 = vmatprep.subr.bf16.mxu0 0
        %1037 = vmatpush1.bf16.msra.mxu0 0
        %1038 = vmatprep.subr.bf16.mxu0 0
        %1039 = vmatpush1.bf16.msra.mxu0 0
        %1040 = vmatprep.subr.bf16.mxu0 0
        %1041 = vmatpush1.bf16.msra.mxu0 0
        %1042 = vmatprep.subr.bf16.mxu0 0
        %1043 = vmatpush1.bf16.msra.mxu0 0
        %1044 = vmatprep.subr.bf16.mxu0 0
        %1045 = vmatpush1.bf16.msra.mxu0 0
        %1046 = vmatprep.subr.bf16.mxu0 0
        %1047 = vmatpush1.bf16.msra.mxu0 0
        %1048 = vmatprep.subr.bf16.mxu0 0
        %1049 = vmatpush1.bf16.msra.mxu0 0
        %1050 = vmatprep.subr.bf16.mxu0 0
        %1051 = vmatpush1.bf16.msra.mxu0 0
        %1052 = vmatprep.subr.bf16.mxu0 0
        %1053 = vmatpush1.bf16.msra.mxu0 0
        %1054 = vmatprep.subr.bf16.mxu0 0
        %1055 = vmatpush1.bf16.msra.mxu0 0
        %1056 = vmatprep.subr.bf16.mxu0 0
        %1057 = vmatpush1.bf16.msra.mxu0 0
        %1058 = vmatprep.subr.bf16.mxu0 0
        %1059 = vmatpush1.bf16.msra.mxu0 0
        %1060 = vmatprep.subr.bf16.mxu0 0
        %1061 = vmatpush1.bf16.msra.mxu0 0
        %1062 = vmatprep.mubr.bf16.mxu0 0
        %1063 = vmatmul.mubr.bf16.gmra.mrb[0].mxu0 %v1025
        %v1064 = vpop.f32.mrb[0].mxu0
        %v1065 = vadd.f32 0.0, %v1064
        %v1066 = vpop.f32.mrb[0].mxu0
        %v1067 = vpop.f32.mrb[0].mxu0
        %v1068 = vpop.f32.mrb[0].mxu0
        %1069 = vdwg.mxu0
        %v1070 = vmul.f32 %v1065, %v1022
        %v1071 = vpack.c.bf16 %v1070, %v1070
        %s1072 = scalar_lea.vmem [#allocation14], 4
        %v1073 = vld [vmem:[%s1072] sm:$0xf]
        %v1075 = vsel %vm661, %v1071, 0
        %v1078 = vsel %vm722, %v1073, 0
        %1080 = vmatprep.subr.bf16.mxu0 0
        %1081 = vmatpush1.bf16.msra.mxu0 %v1078
        %1082 = vmatprep.subr.bf16.mxu0 0
        %1083 = vmatpush1.bf16.msra.mxu0 0
        %1084 = vmatprep.subr.bf16.mxu0 0
        %1085 = vmatpush1.bf16.msra.mxu0 0
        %1086 = vmatprep.subr.bf16.mxu0 0
        %1087 = vmatpush1.bf16.msra.mxu0 0
        %1088 = vmatprep.subr.bf16.mxu0 0
        %1089 = vmatpush1.bf16.msra.mxu0 0
        %1090 = vmatprep.subr.bf16.mxu0 0
        %1091 = vmatpush1.bf16.msra.mxu0 0
        %1092 = vmatprep.subr.bf16.mxu0 0
        %1093 = vmatpush1.bf16.msra.mxu0 0
        %1094 = vmatprep.subr.bf16.mxu0 0
        %1095 = vmatpush1.bf16.msra.mxu0 0
        %1096 = vmatprep.subr.bf16.mxu0 0
        %1097 = vmatpush1.bf16.msra.mxu0 0
        %1098 = vmatprep.subr.bf16.mxu0 0
        %1099 = vmatpush1.bf16.msra.mxu0 0
        %1100 = vmatprep.subr.bf16.mxu0 0
        %1101 = vmatpush1.bf16.msra.mxu0 0
        %1102 = vmatprep.subr.bf16.mxu0 0
        %1103 = vmatpush1.bf16.msra.mxu0 0
        %1104 = vmatprep.subr.bf16.mxu0 0
        %1105 = vmatpush1.bf16.msra.mxu0 0
        %1106 = vmatprep.subr.bf16.mxu0 0
        %1107 = vmatpush1.bf16.msra.mxu0 0
        %1108 = vmatprep.subr.bf16.mxu0 0
        %1109 = vmatpush1.bf16.msra.mxu0 0
        %1110 = vmatprep.subr.bf16.mxu0 0
        %1111 = vmatpush1.bf16.msra.mxu0 0
        %1112 = vmatprep.mubr.bf16.mxu0 0
        %1113 = vmatmul.mubr.bf16.gmra.mrb[0].mxu0 %v1075
        %v1114 = vpop.f32.mrb[0].mxu0
        %v1115 = vadd.f32 0.0, %v1114
        %v1116 = vpop.f32.mrb[0].mxu0
        %v1117 = vpop.f32.mrb[0].mxu0
        %v1118 = vpop.f32.mrb[0].mxu0
        %1119 = vdwg.mxu0
        %v1121 = vsel %vm661, %v767, 0
        %v1124 = vsel %vm722, %v768, 0
        %1126 = vmatprep.subr.bf16.mxu0 0
        %1127 = vmatpush1.bf16.msra.mxu0 %v1124
        %1128 = vmatprep.subr.bf16.mxu0 0
        %1129 = vmatpush1.bf16.msra.mxu0 0
        %1130 = vmatprep.subr.bf16.mxu0 0
        %1131 = vmatpush1.bf16.msra.mxu0 0
        %1132 = vmatprep.subr.bf16.mxu0 0
        %1133 = vmatpush1.bf16.msra.mxu0 0
        %1134 = vmatprep.subr.bf16.mxu0 0
        %1135 = vmatpush1.bf16.msra.mxu0 0
        %1136 = vmatprep.subr.bf16.mxu0 0
        %1137 = vmatpush1.bf16.msra.mxu0 0
        %1138 = vmatprep.subr.bf16.mxu0 0
        %1139 = vmatpush1.bf16.msra.mxu0 0
        %1140 = vmatprep.subr.bf16.mxu0 0
        %1141 = vmatpush1.bf16.msra.mxu0 0
        %1142 = vmatprep.subr.bf16.mxu0 0
        %1143 = vmatpush1.bf16.msra.mxu0 0
        %1144 = vmatprep.subr.bf16.mxu0 0
        %1145 = vmatpush1.bf16.msra.mxu0 0
        %1146 = vmatprep.subr.bf16.mxu0 0
        %1147 = vmatpush1.bf16.msra.mxu0 0
        %1148 = vmatprep.subr.bf16.mxu0 0
        %1149 = vmatpush1.bf16.msra.mxu0 0
        %1150 = vmatprep.subr.bf16.mxu0 0
        %1151 = vmatpush1.bf16.msra.mxu0 0
        %1152 = vmatprep.subr.bf16.mxu0 0
        %1153 = vmatpush1.bf16.msra.mxu0 0
        %1154 = vmatprep.subr.bf16.mxu0 0
        %1155 = vmatpush1.bf16.msra.mxu0 0
        %1156 = vmatprep.subr.bf16.mxu0 0
        %1157 = vmatpush1.bf16.msra.mxu0 0
        %1158 = vmatprep.mubr.bf16.mxu0 0
        %1159 = vmatmul.mubr.bf16.gmra.mrb[0].mxu0 %v1121
        %v1160 = vpop.f32.mrb[0].mxu0
        %v1161 = vadd.f32 %v1115, %v1160
        %v1162 = vpop.f32.mrb[0].mxu0
        %v1163 = vpop.f32.mrb[0].mxu0
        %v1164 = vpop.f32.mrb[0].mxu0
        %1165 = vdwg.mxu0
        %s1166 = scalar_lea.vmem [#allocation5], 32
        %v1167 = vld [vmem:[%s1166] sm:$0xf]
        %v1168 = vld [vmem:[%s1166 + $0x4] sm:$0xf]
        %v1169 = vld [vmem:[%s1166 + $0x8] sm:$0xf]
        %v1170 = vld [vmem:[%s1166 + $0xc] sm:$0xf]
        %s1171 = scalar_lea.vmem [#allocation10], 2
        %v1172 = vld [vmem:[%s1171] sm:$0x1]
        %v1174 = vlaneseq
        %v1175 = vshrl.u32 %v1174, 7
        %v1176 = vsub.s32 0, %v1175
        %v1177 = vrot.slane %v1172, %v1176
        %v1183 = vunpack.c.l.b16 %v1167
        %v1184 = vunpack.c.l.b16 %v1168
        %v1185 = vunpack.c.l.b16 %v1169
        %v1186 = vunpack.c.l.b16 %v1170
        %v1187 = vpack.c.b16 %v1184, %v1183
        %v1188 = vpack.c.b16 %v1186, %v1185
        %1191 = vmatprep.subr.bf16.mxu0 0
        %1192 = vmatpush1.bf16.msra.mxu0 %v1187
        %1193 = vmatprep.subr.bf16.mxu0 0
        %1194 = vmatpush1.bf16.msra.mxu0 %v1188
        %1195 = vmatprep.subr.bf16.mxu0 0
        %1196 = vmatpush1.bf16.msra.mxu0 0
        %1197 = vmatprep.subr.bf16.mxu0 0
        %1198 = vmatpush1.bf16.msra.mxu0 0
        %1199 = vmatprep.subr.bf16.mxu0 0
        %1200 = vmatpush1.bf16.msra.mxu0 0
        %1201 = vmatprep.subr.bf16.mxu0 0
        %1202 = vmatpush1.bf16.msra.mxu0 0
        %1203 = vmatprep.subr.bf16.mxu0 0
        %1204 = vmatpush1.bf16.msra.mxu0 0
        %1205 = vmatprep.subr.bf16.mxu0 0
        %1206 = vmatpush1.bf16.msra.mxu0 0
        %1207 = vmatprep.subr.bf16.mxu0 0
        %1208 = vmatpush1.bf16.msra.mxu0 0
        %1209 = vmatprep.subr.bf16.mxu0 0
        %1210 = vmatpush1.bf16.msra.mxu0 0
        %1211 = vmatprep.subr.bf16.mxu0 0
        %1212 = vmatpush1.bf16.msra.mxu0 0
        %1213 = vmatprep.subr.bf16.mxu0 0
        %1214 = vmatpush1.bf16.msra.mxu0 0
        %1215 = vmatprep.subr.bf16.mxu0 0
        %1216 = vmatpush1.bf16.msra.mxu0 0
        %1217 = vmatprep.subr.bf16.mxu0 0
        %1218 = vmatpush1.bf16.msra.mxu0 0
        %1219 = vmatprep.subr.bf16.mxu0 0
        %1220 = vmatpush1.bf16.msra.mxu0 0
        %1221 = vmatprep.subr.bf16.mxu0 0
        %1222 = vmatpush1.bf16.msra.mxu0 0
        %1223 = vmatprep.mubr.bf16.mxu0 0
        %1224 = vmatmul.mubr.bf16.gmra.mrb[0].mxu0 %v490
        %v1225 = vpop.f32.mrb[0].mxu0
        %v1226 = vadd.f32 %v1177, %v1225
        %v1227 = vpop.f32.mrb[0].mxu0
        %v1228 = vpop.f32.mrb[0].mxu0
        %v1229 = vpop.f32.mrb[0].mxu0
        %1230 = vdwg.mxu0
        %s1231 = scalar_lea.vmem [#allocation7], 32
        %v1232 = vld [vmem:[%s1231] sm:$0xf]
        %v1233 = vld [vmem:[%s1231 + $0x4] sm:$0xf]
        %v1234 = vld [vmem:[%s1231 + $0x8] sm:$0xf]
        %v1235 = vld [vmem:[%s1231 + $0xc] sm:$0xf]
        %s1236 = scalar_lea.vmem [#allocation11], 2
        %v1237 = vld [vmem:[%s1236] sm:$0x1]
        %v1239 = vlaneseq
        %v1240 = vshrl.u32 %v1239, 7
        %v1241 = vsub.s32 0, %v1240
        %v1242 = vrot.slane %v1237, %v1241
        %v1248 = vunpack.c.l.b16 %v1232
        %v1249 = vunpack.c.l.b16 %v1233
        %v1250 = vunpack.c.l.b16 %v1234
        %v1251 = vunpack.c.l.b16 %v1235
        %v1252 = vpack.c.b16 %v1249, %v1248
        %v1253 = vpack.c.b16 %v1251, %v1250
        %1256 = vmatprep.subr.bf16.mxu0 0
        %1257 = vmatpush1.bf16.msra.mxu0 %v1252
        %1258 = vmatprep.subr.bf16.mxu0 0
        %1259 = vmatpush1.bf16.msra.mxu0 %v1253
        %1260 = vmatprep.subr.bf16.mxu0 0
        %1261 = vmatpush1.bf16.msra.mxu0 0
        %1262 = vmatprep.subr.bf16.mxu0 0
        %1263 = vmatpush1.bf16.msra.mxu0 0
        %1264 = vmatprep.subr.bf16.mxu0 0
        %1265 = vmatpush1.bf16.msra.mxu0 0
        %1266 = vmatprep.subr.bf16.mxu0 0
        %1267 = vmatpush1.bf16.msra.mxu0 0
        %1268 = vmatprep.subr.bf16.mxu0 0
        %1269 = vmatpush1.bf16.msra.mxu0 0
        %1270 = vmatprep.subr.bf16.mxu0 0
        %1271 = vmatpush1.bf16.msra.mxu0 0
        %1272 = vmatprep.subr.bf16.mxu0 0
        %1273 = vmatpush1.bf16.msra.mxu0 0
        %1274 = vmatprep.subr.bf16.mxu0 0
        %1275 = vmatpush1.bf16.msra.mxu0 0
        %1276 = vmatprep.subr.bf16.mxu0 0
        %1277 = vmatpush1.bf16.msra.mxu0 0
        %1278 = vmatprep.subr.bf16.mxu0 0
        %1279 = vmatpush1.bf16.msra.mxu0 0
        %1280 = vmatprep.subr.bf16.mxu0 0
        %1281 = vmatpush1.bf16.msra.mxu0 0
        %1282 = vmatprep.subr.bf16.mxu0 0
        %1283 = vmatpush1.bf16.msra.mxu0 0
        %1284 = vmatprep.subr.bf16.mxu0 0
        %1285 = vmatpush1.bf16.msra.mxu0 0
        %1286 = vmatprep.subr.bf16.mxu0 0
        %1287 = vmatpush1.bf16.msra.mxu0 0
        %1288 = vmatprep.mubr.bf16.mxu0 0
        %1289 = vmatmul.mubr.bf16.gmra.mrb[0].mxu0 %v490
        %v1290 = vpop.f32.mrb[0].mxu0
        %v1291 = vadd.f32 %v1242, %v1290
        %v1292 = vpop.f32.mrb[0].mxu0
        %v1293 = vpop.f32.mrb[0].mxu0
        %v1294 = vpop.f32.mrb[0].mxu0
        %1295 = vdwg.mxu0
        %s1296 = scalar_lea.vmem [#allocation8], 32
        %v1297 = vld [vmem:[%s1296] sm:$0xf]
        %v1298 = vld [vmem:[%s1296 + $0x4] sm:$0xf]
        %v1299 = vld [vmem:[%s1296 + $0x8] sm:$0xf]
        %v1300 = vld [vmem:[%s1296 + $0xc] sm:$0xf]
        %s1301 = scalar_lea.vmem [#allocation13], 2
        %v1302 = vld [vmem:[%s1301] sm:$0x1]
        %v1304 = vlaneseq
        %v1305 = vshrl.u32 %v1304, 7
        %v1306 = vsub.s32 0, %v1305
        %v1307 = vrot.slane %v1302, %v1306
        %v1313 = vunpack.c.l.b16 %v1297
        %v1314 = vunpack.c.l.b16 %v1298
        %v1315 = vunpack.c.l.b16 %v1299
        %v1316 = vunpack.c.l.b16 %v1300
        %v1317 = vpack.c.b16 %v1314, %v1313
        %v1318 = vpack.c.b16 %v1316, %v1315
        %1321 = vmatprep.subr.bf16.mxu0 0
        %1322 = vmatpush1.bf16.msra.mxu0 %v1317
        %1323 = vmatprep.subr.bf16.mxu0 0
        %1324 = vmatpush1.bf16.msra.mxu0 %v1318
        %1325 = vmatprep.subr.bf16.mxu0 0
        %1326 = vmatpush1.bf16.msra.mxu0 0
        %1327 = vmatprep.subr.bf16.mxu0 0
        %1328 = vmatpush1.bf16.msra.mxu0 0
        %1329 = vmatprep.subr.bf16.mxu0 0
        %1330 = vmatpush1.bf16.msra.mxu0 0
        %1331 = vmatprep.subr.bf16.mxu0 0
        %1332 = vmatpush1.bf16.msra.mxu0 0
        %1333 = vmatprep.subr.bf16.mxu0 0
        %1334 = vmatpush1.bf16.msra.mxu0 0
        %1335 = vmatprep.subr.bf16.mxu0 0
        %1336 = vmatpush1.bf16.msra.mxu0 0
        %1337 = vmatprep.subr.bf16.mxu0 0
        %1338 = vmatpush1.bf16.msra.mxu0 0
        %1339 = vmatprep.subr.bf16.mxu0 0
        %1340 = vmatpush1.bf16.msra.mxu0 0
        %1341 = vmatprep.subr.bf16.mxu0 0
        %1342 = vmatpush1.bf16.msra.mxu0 0
        %1343 = vmatprep.subr.bf16.mxu0 0
        %1344 = vmatpush1.bf16.msra.mxu0 0
        %1345 = vmatprep.subr.bf16.mxu0 0
        %1346 = vmatpush1.bf16.msra.mxu0 0
        %1347 = vmatprep.subr.bf16.mxu0 0
        %1348 = vmatpush1.bf16.msra.mxu0 0
        %1349 = vmatprep.subr.bf16.mxu0 0
        %1350 = vmatpush1.bf16.msra.mxu0 0
        %1351 = vmatprep.subr.bf16.mxu0 0
        %1352 = vmatpush1.bf16.msra.mxu0 0
        %1353 = vmatprep.mubr.bf16.mxu0 0
        %1354 = vmatmul.mubr.bf16.gmra.mrb[0].mxu0 %v490
        %v1355 = vpop.f32.mrb[0].mxu0
        %v1356 = vadd.f32 %v1307, %v1355
        %v1357 = vpop.f32.mrb[0].mxu0
        %v1358 = vpop.f32.mrb[0].mxu0
        %v1359 = vpop.f32.mrb[0].mxu0
        %1360 = vdwg.mxu0
        %v1361 = vpack.c.bf16 %v1226, %v1226
        %v1362 = vpack.c.bf16 %v1291, %v1291
        %v1363 = vpack.c.bf16 %v1356, %v1356
        %v1365 = vsel %vm661, %v1361, 0
        %v1368 = vsel %vm661, %v1362, 0
        %1370 = vmatprep.subr.bf16.mxu0 0
        %1371 = vmatpush1.bf16.xpose.msra.mxu0 %v1368
        %1372 = vmatprep.subr.bf16.mxu0 0
        %1373 = vmatpush1.bf16.xpose.msra.mxu0 0
        %1374 = vmatprep.subr.bf16.mxu0 0
        %1375 = vmatpush1.bf16.xpose.msra.mxu0 0
        %1376 = vmatprep.subr.bf16.mxu0 0
        %1377 = vmatpush1.bf16.xpose.msra.mxu0 0
        %1378 = vmatprep.subr.bf16.mxu0 0
        %1379 = vmatpush1.bf16.xpose.msra.mxu0 0
        %1380 = vmatprep.subr.bf16.mxu0 0
        %1381 = vmatpush1.bf16.xpose.msra.mxu0 0
        %1382 = vmatprep.subr.bf16.mxu0 0
        %1383 = vmatpush1.bf16.xpose.msra.mxu0 0
        %1384 = vmatprep.subr.bf16.mxu0 0
        %1385 = vmatpush1.bf16.xpose.msra.mxu0 0
        %1386 = vmatprep.subr.bf16.mxu0 0
        %1387 = vmatpush1.bf16.xpose.msra.mxu0 0
        %1388 = vmatprep.subr.bf16.mxu0 0
        %1389 = vmatpush1.bf16.xpose.msra.mxu0 0
        %1390 = vmatprep.subr.bf16.mxu0 0
        %1391 = vmatpush1.bf16.xpose.msra.mxu0 0
        %1392 = vmatprep.subr.bf16.mxu0 0
        %1393 = vmatpush1.bf16.xpose.msra.mxu0 0
        %1394 = vmatprep.subr.bf16.mxu0 0
        %1395 = vmatpush1.bf16.xpose.msra.mxu0 0
        %1396 = vmatprep.subr.bf16.mxu0 0
        %1397 = vmatpush1.bf16.xpose.msra.mxu0 0
        %1398 = vmatprep.subr.bf16.mxu0 0
        %1399 = vmatpush1.bf16.xpose.msra.mxu0 0
        %1400 = vmatprep.subr.bf16.mxu0 0
        %1401 = vmatpush1.bf16.xpose.msra.mxu0 0
        %1402 = vmatprep.mubr.bf16.mxu0 0
        %1403 = vmatmul.mubr.bf16.gmra.mrb[0].mxu0 %v1365
        %v1404 = vpop.f32.mrb[0].mxu0
        %v1405 = vadd.f32 0.0, %v1404
        %v1406 = vpop.f32.mrb[0].mxu0
        %v1407 = vpop.f32.mrb[0].mxu0
        %v1408 = vpop.f32.mrb[0].mxu0
        %1409 = vdwg.mxu0
        %v1410 = vsel %vm661, %v1405, -inf
        %1411 = vmax.xlane.f32.xlu0 %v1410
        %v1412 = vpop.xlane.xlu0 %1411
        %v1413 = vsub.f32 %v1405, %v1412
        %v1414 = vmul.f32 %v1413, 1.442695
        %v1415 = vpow.pop %v1414
        %v1416 = vsel %vm661, %v1415, 0.0
        %1417 = vadd.xlane.f32.xlu0 %v1416
        %v1418 = vpop.xlane.xlu0 %1417
        %v1419 = vrcp.pop %v1418
        %v1420 = vpack.c.bf16 %v1415, %v1415
        %v1422 = vsel %vm661, %v1420, 0
        %v1425 = vsel %vm722, %v1363, 0
        %1427 = vmatprep.subr.bf16.mxu0 0
        %1428 = vmatpush1.bf16.msra.mxu0 %v1425
        %1429 = vmatprep.subr.bf16.mxu0 0
        %1430 = vmatpush1.bf16.msra.mxu0 0
        %1431 = vmatprep.subr.bf16.mxu0 0
        %1432 = vmatpush1.bf16.msra.mxu0 0
        %1433 = vmatprep.subr.bf16.mxu0 0
        %1434 = vmatpush1.bf16.msra.mxu0 0
        %1435 = vmatprep.subr.bf16.mxu0 0
        %1436 = vmatpush1.bf16.msra.mxu0 0
        %1437 = vmatprep.subr.bf16.mxu0 0
        %1438 = vmatpush1.bf16.msra.mxu0 0
        %1439 = vmatprep.subr.bf16.mxu0 0
        %1440 = vmatpush1.bf16.msra.mxu0 0
        %1441 = vmatprep.subr.bf16.mxu0 0
        %1442 = vmatpush1.bf16.msra.mxu0 0
        %1443 = vmatprep.subr.bf16.mxu0 0
        %1444 = vmatpush1.bf16.msra.mxu0 0
        %1445 = vmatprep.subr.bf16.mxu0 0
        %1446 = vmatpush1.bf16.msra.mxu0 0
        %1447 = vmatprep.subr.bf16.mxu0 0
        %1448 = vmatpush1.bf16.msra.mxu0 0
        %1449 = vmatprep.subr.bf16.mxu0 0
        %1450 = vmatpush1.bf16.msra.mxu0 0
        %1451 = vmatprep.subr.bf16.mxu0 0
        %1452 = vmatpush1.bf16.msra.mxu0 0
        %1453 = vmatprep.subr.bf16.mxu0 0
        %1454 = vmatpush1.bf16.msra.mxu0 0
        %1455 = vmatprep.subr.bf16.mxu0 0
        %1456 = vmatpush1.bf16.msra.mxu0 0
        %1457 = vmatprep.subr.bf16.mxu0 0
        %1458 = vmatpush1.bf16.msra.mxu0 0
        %1459 = vmatprep.mubr.bf16.mxu0 0
        %1460 = vmatmul.mubr.bf16.gmra.mrb[0].mxu0 %v1422
        %v1461 = vpop.f32.mrb[0].mxu0
        %v1462 = vadd.f32 0.0, %v1461
        %v1463 = vpop.f32.mrb[0].mxu0
        %v1464 = vpop.f32.mrb[0].mxu0
        %v1465 = vpop.f32.mrb[0].mxu0
        %1466 = vdwg.mxu0
        %v1467 = vmul.f32 %v1462, %v1419
        %v1468 = vpack.c.bf16 %v1467, %v1467
        %s1469 = scalar_lea.vmem [#allocation14], 8
        %v1470 = vld [vmem:[%s1469] sm:$0xf]
        %v1472 = vsel %vm661, %v1468, 0
        %v1475 = vsel %vm722, %v1470, 0
        %1477 = vmatprep.subr.bf16.mxu0 0
        %1478 = vmatpush1.bf16.msra.mxu0 %v1475
        %1479 = vmatprep.subr.bf16.mxu0 0
        %1480 = vmatpush1.bf16.msra.mxu0 0
        %1481 = vmatprep.subr.bf16.mxu0 0
        %1482 = vmatpush1.bf16.msra.mxu0 0
        %1483 = vmatprep.subr.bf16.mxu0 0
        %1484 = vmatpush1.bf16.msra.mxu0 0
        %1485 = vmatprep.subr.bf16.mxu0 0
        %1486 = vmatpush1.bf16.msra.mxu0 0
        %1487 = vmatprep.subr.bf16.mxu0 0
        %1488 = vmatpush1.bf16.msra.mxu0 0
        %1489 = vmatprep.subr.bf16.mxu0 0
        %1490 = vmatpush1.bf16.msra.mxu0 0
        %1491 = vmatprep.subr.bf16.mxu0 0
        %1492 = vmatpush1.bf16.msra.mxu0 0
        %1493 = vmatprep.subr.bf16.mxu0 0
        %1494 = vmatpush1.bf16.msra.mxu0 0
        %1495 = vmatprep.subr.bf16.mxu0 0
        %1496 = vmatpush1.bf16.msra.mxu0 0
        %1497 = vmatprep.subr.bf16.mxu0 0
        %1498 = vmatpush1.bf16.msra.mxu0 0
        %1499 = vmatprep.subr.bf16.mxu0 0
        %1500 = vmatpush1.bf16.msra.mxu0 0
        %1501 = vmatprep.subr.bf16.mxu0 0
        %1502 = vmatpush1.bf16.msra.mxu0 0
        %1503 = vmatprep.subr.bf16.mxu0 0
        %1504 = vmatpush1.bf16.msra.mxu0 0
        %1505 = vmatprep.subr.bf16.mxu0 0
        %1506 = vmatpush1.bf16.msra.mxu0 0
        %1507 = vmatprep.subr.bf16.mxu0 0
        %1508 = vmatpush1.bf16.msra.mxu0 0
        %1509 = vmatprep.mubr.bf16.mxu0 0
        %1510 = vmatmul.mubr.bf16.gmra.mrb[0].mxu0 %v1472
        %v1511 = vpop.f32.mrb[0].mxu0
        %v1512 = vadd.f32 0.0, %v1511
        %v1513 = vpop.f32.mrb[0].mxu0
        %v1514 = vpop.f32.mrb[0].mxu0
        %v1515 = vpop.f32.mrb[0].mxu0
        %1516 = vdwg.mxu0
        %v1517 = vadd.f32 %v1161, %v1512
        %s1518 = scalar_lea.vmem [#allocation5], 48
        %v1519 = vld [vmem:[%s1518] sm:$0xf]
        %v1520 = vld [vmem:[%s1518 + $0x4] sm:$0xf]
        %v1521 = vld [vmem:[%s1518 + $0x8] sm:$0xf]
        %v1522 = vld [vmem:[%s1518 + $0xc] sm:$0xf]
        %s1523 = scalar_lea.vmem [#allocation10], 3
        %v1524 = vld [vmem:[%s1523] sm:$0x1]
        %v1526 = vlaneseq
        %v1527 = vshrl.u32 %v1526, 7
        %v1528 = vsub.s32 0, %v1527
        %v1529 = vrot.slane %v1524, %v1528
        %v1535 = vunpack.c.l.b16 %v1519
        %v1536 = vunpack.c.l.b16 %v1520
        %v1537 = vunpack.c.l.b16 %v1521
        %v1538 = vunpack.c.l.b16 %v1522
        %v1539 = vpack.c.b16 %v1536, %v1535
        %v1540 = vpack.c.b16 %v1538, %v1537
        %1543 = vmatprep.subr.bf16.mxu0 0
        %1544 = vmatpush1.bf16.msra.mxu0 %v1539
        %1545 = vmatprep.subr.bf16.mxu0 0
        %1546 = vmatpush1.bf16.msra.mxu0 %v1540
        %1547 = vmatprep.subr.bf16.mxu0 0
        %1548 = vmatpush1.bf16.msra.mxu0 0
        %1549 = vmatprep.subr.bf16.mxu0 0
        %1550 = vmatpush1.bf16.msra.mxu0 0
        %1551 = vmatprep.subr.bf16.mxu0 0
        %1552 = vmatpush1.bf16.msra.mxu0 0
        %1553 = vmatprep.subr.bf16.mxu0 0
        %1554 = vmatpush1.bf16.msra.mxu0 0
        %1555 = vmatprep.subr.bf16.mxu0 0
        %1556 = vmatpush1.bf16.msra.mxu0 0
        %1557 = vmatprep.subr.bf16.mxu0 0
        %1558 = vmatpush1.bf16.msra.mxu0 0
        %1559 = vmatprep.subr.bf16.mxu0 0
        %1560 = vmatpush1.bf16.msra.mxu0 0
        %1561 = vmatprep.subr.bf16.mxu0 0
        %1562 = vmatpush1.bf16.msra.mxu0 0
        %1563 = vmatprep.subr.bf16.mxu0 0
        %1564 = vmatpush1.bf16.msra.mxu0 0
        %1565 = vmatprep.subr.bf16.mxu0 0
        %1566 = vmatpush1.bf16.msra.mxu0 0
        %1567 = vmatprep.subr.bf16.mxu0 0
        %1568 = vmatpush1.bf16.msra.mxu0 0
        %1569 = vmatprep.subr.bf16.mxu0 0
        %1570 = vmatpush1.bf16.msra.mxu0 0
        %1571 = vmatprep.subr.bf16.mxu0 0
        %1572 = vmatpush1.bf16.msra.mxu0 0
        %1573 = vmatprep.subr.bf16.mxu0 0
        %1574 = vmatpush1.bf16.msra.mxu0 0
        %1575 = vmatprep.mubr.bf16.mxu0 0
        %1576 = vmatmul.mubr.bf16.gmra.mrb[0].mxu0 %v490
        %v1577 = vpop.f32.mrb[0].mxu0
        %v1578 = vadd.f32 %v1529, %v1577
        %v1579 = vpop.f32.mrb[0].mxu0
        %v1580 = vpop.f32.mrb[0].mxu0
        %v1581 = vpop.f32.mrb[0].mxu0
        %1582 = vdwg.mxu0
        %s1583 = scalar_lea.vmem [#allocation7], 48
        %v1584 = vld [vmem:[%s1583] sm:$0xf]
        %v1585 = vld [vmem:[%s1583 + $0x4] sm:$0xf]
        %v1586 = vld [vmem:[%s1583 + $0x8] sm:$0xf]
        %v1587 = vld [vmem:[%s1583 + $0xc] sm:$0xf]
        %s1588 = scalar_lea.vmem [#allocation11], 3
        %v1589 = vld [vmem:[%s1588] sm:$0x1]
        %v1591 = vlaneseq
        %v1592 = vshrl.u32 %v1591, 7
        %v1593 = vsub.s32 0, %v1592
        %v1594 = vrot.slane %v1589, %v1593
        %v1600 = vunpack.c.l.b16 %v1584
        %v1601 = vunpack.c.l.b16 %v1585
        %v1602 = vunpack.c.l.b16 %v1586
        %v1603 = vunpack.c.l.b16 %v1587
        %v1604 = vpack.c.b16 %v1601, %v1600
        %v1605 = vpack.c.b16 %v1603, %v1602
        %1608 = vmatprep.subr.bf16.mxu0 0
        %1609 = vmatpush1.bf16.msra.mxu0 %v1604
        %1610 = vmatprep.subr.bf16.mxu0 0
        %1611 = vmatpush1.bf16.msra.mxu0 %v1605
        %1612 = vmatprep.subr.bf16.mxu0 0
        %1613 = vmatpush1.bf16.msra.mxu0 0
        %1614 = vmatprep.subr.bf16.mxu0 0
        %1615 = vmatpush1.bf16.msra.mxu0 0
        %1616 = vmatprep.subr.bf16.mxu0 0
        %1617 = vmatpush1.bf16.msra.mxu0 0
        %1618 = vmatprep.subr.bf16.mxu0 0
        %1619 = vmatpush1.bf16.msra.mxu0 0
        %1620 = vmatprep.subr.bf16.mxu0 0
        %1621 = vmatpush1.bf16.msra.mxu0 0
        %1622 = vmatprep.subr.bf16.mxu0 0
        %1623 = vmatpush1.bf16.msra.mxu0 0
        %1624 = vmatprep.subr.bf16.mxu0 0
        %1625 = vmatpush1.bf16.msra.mxu0 0
        %1626 = vmatprep.subr.bf16.mxu0 0
        %1627 = vmatpush1.bf16.msra.mxu0 0
        %1628 = vmatprep.subr.bf16.mxu0 0
        %1629 = vmatpush1.bf16.msra.mxu0 0
        %1630 = vmatprep.subr.bf16.mxu0 0
        %1631 = vmatpush1.bf16.msra.mxu0 0
        %1632 = vmatprep.subr.bf16.mxu0 0
        %1633 = vmatpush1.bf16.msra.mxu0 0
        %1634 = vmatprep.subr.bf16.mxu0 0
        %1635 = vmatpush1.bf16.msra.mxu0 0
        %1636 = vmatprep.subr.bf16.mxu0 0
        %1637 = vmatpush1.bf16.msra.mxu0 0
        %1638 = vmatprep.subr.bf16.mxu0 0
        %1639 = vmatpush1.bf16.msra.mxu0 0
        %1640 = vmatprep.mubr.bf16.mxu0 0
        %1641 = vmatmul.mubr.bf16.gmra.mrb[0].mxu0 %v490
        %v1642 = vpop.f32.mrb[0].mxu0
        %v1643 = vadd.f32 %v1594, %v1642
        %v1644 = vpop.f32.mrb[0].mxu0
        %v1645 = vpop.f32.mrb[0].mxu0
        %v1646 = vpop.f32.mrb[0].mxu0
        %1647 = vdwg.mxu0
        %s1648 = scalar_lea.vmem [#allocation8], 48
        %v1649 = vld [vmem:[%s1648] sm:$0xf]
        %v1650 = vld [vmem:[%s1648 + $0x4] sm:$0xf]
        %v1651 = vld [vmem:[%s1648 + $0x8] sm:$0xf]
        %v1652 = vld [vmem:[%s1648 + $0xc] sm:$0xf]
        %s1653 = scalar_lea.vmem [#allocation13], 3
        %v1654 = vld [vmem:[%s1653] sm:$0x1]
        %v1656 = vlaneseq
        %v1657 = vshrl.u32 %v1656, 7
        %v1658 = vsub.s32 0, %v1657
        %v1659 = vrot.slane %v1654, %v1658
        %v1665 = vunpack.c.l.b16 %v1649
        %v1666 = vunpack.c.l.b16 %v1650
        %v1667 = vunpack.c.l.b16 %v1651
        %v1668 = vunpack.c.l.b16 %v1652
        %v1669 = vpack.c.b16 %v1666, %v1665
        %v1670 = vpack.c.b16 %v1668, %v1667
        %1673 = vmatprep.subr.bf16.mxu0 0
        %1674 = vmatpush1.bf16.msra.mxu0 %v1669
        %1675 = vmatprep.subr.bf16.mxu0 0
        %1676 = vmatpush1.bf16.msra.mxu0 %v1670
        %1677 = vmatprep.subr.bf16.mxu0 0
        %1678 = vmatpush1.bf16.msra.mxu0 0
        %1679 = vmatprep.subr.bf16.mxu0 0
        %1680 = vmatpush1.bf16.msra.mxu0 0
        %1681 = vmatprep.subr.bf16.mxu0 0
        %1682 = vmatpush1.bf16.msra.mxu0 0
        %1683 = vmatprep.subr.bf16.mxu0 0
        %1684 = vmatpush1.bf16.msra.mxu0 0
        %1685 = vmatprep.subr.bf16.mxu0 0
        %1686 = vmatpush1.bf16.msra.mxu0 0
        %1687 = vmatprep.subr.bf16.mxu0 0
        %1688 = vmatpush1.bf16.msra.mxu0 0
        %1689 = vmatprep.subr.bf16.mxu0 0
        %1690 = vmatpush1.bf16.msra.mxu0 0
        %1691 = vmatprep.subr.bf16.mxu0 0
        %1692 = vmatpush1.bf16.msra.mxu0 0
        %1693 = vmatprep.subr.bf16.mxu0 0
        %1694 = vmatpush1.bf16.msra.mxu0 0
        %1695 = vmatprep.subr.bf16.mxu0 0
        %1696 = vmatpush1.bf16.msra.mxu0 0
        %1697 = vmatprep.subr.bf16.mxu0 0
        %1698 = vmatpush1.bf16.msra.mxu0 0
        %1699 = vmatprep.subr.bf16.mxu0 0
        %1700 = vmatpush1.bf16.msra.mxu0 0
        %1701 = vmatprep.subr.bf16.mxu0 0
        %1702 = vmatpush1.bf16.msra.mxu0 0
        %1703 = vmatprep.subr.bf16.mxu0 0
        %1704 = vmatpush1.bf16.msra.mxu0 0
        %1705 = vmatprep.mubr.bf16.mxu0 0
        %1706 = vmatmul.mubr.bf16.gmra.mrb[0].mxu0 %v490
        %v1707 = vpop.f32.mrb[0].mxu0
        %v1708 = vadd.f32 %v1659, %v1707
        %v1709 = vpop.f32.mrb[0].mxu0
        %v1710 = vpop.f32.mrb[0].mxu0
        %v1711 = vpop.f32.mrb[0].mxu0
        %1712 = vdwg.mxu0
        %v1713 = vpack.c.bf16 %v1578, %v1578
        %v1714 = vpack.c.bf16 %v1643, %v1643
        %v1715 = vpack.c.bf16 %v1708, %v1708
        %v1717 = vsel %vm661, %v1713, 0
        %v1720 = vsel %vm661, %v1714, 0
        %1722 = vmatprep.subr.bf16.mxu0 0
        %1723 = vmatpush1.bf16.xpose.msra.mxu0 %v1720
        %1724 = vmatprep.subr.bf16.mxu0 0
        %1725 = vmatpush1.bf16.xpose.msra.mxu0 0
        %1726 = vmatprep.subr.bf16.mxu0 0
        %1727 = vmatpush1.bf16.xpose.msra.mxu0 0
        %1728 = vmatprep.subr.bf16.mxu0 0
        %1729 = vmatpush1.bf16.xpose.msra.mxu0 0
        %1730 = vmatprep.subr.bf16.mxu0 0
        %1731 = vmatpush1.bf16.xpose.msra.mxu0 0
        %1732 = vmatprep.subr.bf16.mxu0 0
        %1733 = vmatpush1.bf16.xpose.msra.mxu0 0
        %1734 = vmatprep.subr.bf16.mxu0 0
        %1735 = vmatpush1.bf16.xpose.msra.mxu0 0
        %1736 = vmatprep.subr.bf16.mxu0 0
        %1737 = vmatpush1.bf16.xpose.msra.mxu0 0
        %1738 = vmatprep.subr.bf16.mxu0 0
        %1739 = vmatpush1.bf16.xpose.msra.mxu0 0
        %1740 = vmatprep.subr.bf16.mxu0 0
        %1741 = vmatpush1.bf16.xpose.msra.mxu0 0
        %1742 = vmatprep.subr.bf16.mxu0 0
        %1743 = vmatpush1.bf16.xpose.msra.mxu0 0
        %1744 = vmatprep.subr.bf16.mxu0 0
        %1745 = vmatpush1.bf16.xpose.msra.mxu0 0
        %1746 = vmatprep.subr.bf16.mxu0 0
        %1747 = vmatpush1.bf16.xpose.msra.mxu0 0
        %1748 = vmatprep.subr.bf16.mxu0 0
        %1749 = vmatpush1.bf16.xpose.msra.mxu0 0
        %1750 = vmatprep.subr.bf16.mxu0 0
        %1751 = vmatpush1.bf16.xpose.msra.mxu0 0
        %1752 = vmatprep.subr.bf16.mxu0 0
        %1753 = vmatpush1.bf16.xpose.msra.mxu0 0
        %1754 = vmatprep.mubr.bf16.mxu0 0
        %1755 = vmatmul.mubr.bf16.gmra.mrb[0].mxu0 %v1717
        %v1756 = vpop.f32.mrb[0].mxu0
        %v1757 = vadd.f32 0.0, %v1756
        %v1758 = vpop.f32.mrb[0].mxu0
        %v1759 = vpop.f32.mrb[0].mxu0
        %v1760 = vpop.f32.mrb[0].mxu0
        %1761 = vdwg.mxu0
        %v1762 = vsel %vm661, %v1757, -inf
        %1763 = vmax.xlane.f32.xlu0 %v1762
        %v1764 = vpop.xlane.xlu0 %1763
        %v1765 = vsub.f32 %v1757, %v1764
        %v1766 = vmul.f32 %v1765, 1.442695
        %v1767 = vpow.pop %v1766
        %v1768 = vsel %vm661, %v1767, 0.0
        %1769 = vadd.xlane.f32.xlu0 %v1768
        %v1770 = vpop.xlane.xlu0 %1769
        %v1771 = vrcp.pop %v1770
        %v1772 = vpack.c.bf16 %v1767, %v1767
        %v1774 = vsel %vm661, %v1772, 0
        %v1777 = vsel %vm722, %v1715, 0
        %1779 = vmatprep.subr.bf16.mxu0 0
        %1780 = vmatpush1.bf16.msra.mxu0 %v1777
        %1781 = vmatprep.subr.bf16.mxu0 0
        %1782 = vmatpush1.bf16.msra.mxu0 0
        %1783 = vmatprep.subr.bf16.mxu0 0
        %1784 = vmatpush1.bf16.msra.mxu0 0
        %1785 = vmatprep.subr.bf16.mxu0 0
        %1786 = vmatpush1.bf16.msra.mxu0 0
        %1787 = vmatprep.subr.bf16.mxu0 0
        %1788 = vmatpush1.bf16.msra.mxu0 0
        %1789 = vmatprep.subr.bf16.mxu0 0
        %1790 = vmatpush1.bf16.msra.mxu0 0
        %1791 = vmatprep.subr.bf16.mxu0 0
        %1792 = vmatpush1.bf16.msra.mxu0 0
        %1793 = vmatprep.subr.bf16.mxu0 0
        %1794 = vmatpush1.bf16.msra.mxu0 0
        %1795 = vmatprep.subr.bf16.mxu0 0
        %1796 = vmatpush1.bf16.msra.mxu0 0
        %1797 = vmatprep.subr.bf16.mxu0 0
        %1798 = vmatpush1.bf16.msra.mxu0 0
        %1799 = vmatprep.subr.bf16.mxu0 0
        %1800 = vmatpush1.bf16.msra.mxu0 0
        %1801 = vmatprep.subr.bf16.mxu0 0
        %1802 = vmatpush1.bf16.msra.mxu0 0
        %1803 = vmatprep.subr.bf16.mxu0 0
        %1804 = vmatpush1.bf16.msra.mxu0 0
        %1805 = vmatprep.subr.bf16.mxu0 0
        %1806 = vmatpush1.bf16.msra.mxu0 0
        %1807 = vmatprep.subr.bf16.mxu0 0
        %1808 = vmatpush1.bf16.msra.mxu0 0
        %1809 = vmatprep.subr.bf16.mxu0 0
        %1810 = vmatpush1.bf16.msra.mxu0 0
        %1811 = vmatprep.mubr.bf16.mxu0 0
        %1812 = vmatmul.mubr.bf16.gmra.mrb[0].mxu0 %v1774
        %v1813 = vpop.f32.mrb[0].mxu0
        %v1814 = vadd.f32 0.0, %v1813
        %v1815 = vpop.f32.mrb[0].mxu0
        %v1816 = vpop.f32.mrb[0].mxu0
        %v1817 = vpop.f32.mrb[0].mxu0
        %1818 = vdwg.mxu0
        %v1819 = vmul.f32 %v1814, %v1771
        %v1820 = vpack.c.bf16 %v1819, %v1819
        %s1821 = scalar_lea.vmem [#allocation14], 12
        %v1822 = vld [vmem:[%s1821] sm:$0xf]
        %v1824 = vsel %vm661, %v1820, 0
        %v1827 = vsel %vm722, %v1822, 0
        %1829 = vmatprep.subr.bf16.mxu0 0
        %1830 = vmatpush1.bf16.msra.mxu0 %v1827
        %1831 = vmatprep.subr.bf16.mxu0 0
        %1832 = vmatpush1.bf16.msra.mxu0 0
        %1833 = vmatprep.subr.bf16.mxu0 0
        %1834 = vmatpush1.bf16.msra.mxu0 0
        %1835 = vmatprep.subr.bf16.mxu0 0
        %1836 = vmatpush1.bf16.msra.mxu0 0
        %1837 = vmatprep.subr.bf16.mxu0 0
        %1838 = vmatpush1.bf16.msra.mxu0 0
        %1839 = vmatprep.subr.bf16.mxu0 0
        %1840 = vmatpush1.bf16.msra.mxu0 0
        %1841 = vmatprep.subr.bf16.mxu0 0
        %1842 = vmatpush1.bf16.msra.mxu0 0
        %1843 = vmatprep.subr.bf16.mxu0 0
        %1844 = vmatpush1.bf16.msra.mxu0 0
        %1845 = vmatprep.subr.bf16.mxu0 0
        %1846 = vmatpush1.bf16.msra.mxu0 0
        %1847 = vmatprep.subr.bf16.mxu0 0
        %1848 = vmatpush1.bf16.msra.mxu0 0
        %1849 = vmatprep.subr.bf16.mxu0 0
        %1850 = vmatpush1.bf16.msra.mxu0 0
        %1851 = vmatprep.subr.bf16.mxu0 0
        %1852 = vmatpush1.bf16.msra.mxu0 0
        %1853 = vmatprep.subr.bf16.mxu0 0
        %1854 = vmatpush1.bf16.msra.mxu0 0
        %1855 = vmatprep.subr.bf16.mxu0 0
        %1856 = vmatpush1.bf16.msra.mxu0 0
        %1857 = vmatprep.subr.bf16.mxu0 0
        %1858 = vmatpush1.bf16.msra.mxu0 0
        %1859 = vmatprep.subr.bf16.mxu0 0
        %1860 = vmatpush1.bf16.msra.mxu0 0
        %1861 = vmatprep.mubr.bf16.mxu0 0
        %1862 = vmatmul.mubr.bf16.gmra.mrb[0].mxu0 %v1824
        %v1863 = vpop.f32.mrb[0].mxu0
        %v1864 = vadd.f32 0.0, %v1863
        %v1865 = vpop.f32.mrb[0].mxu0
        %v1866 = vpop.f32.mrb[0].mxu0
        %v1867 = vpop.f32.mrb[0].mxu0
        %1868 = vdwg.mxu0
        %v1869 = vadd.f32 %v1517, %v1864
        %v1870 = vld [vmem:[#allocation16] sm:$0x1]
        %v1872 = vlaneseq
        %v1873 = vshrl.u32 %v1872, 7
        %v1874 = vsub.s32 0, %v1873
        %v1875 = vrot.slane %v1870, %v1874
        %v1877 = vadd.f32 %v1869, %v1875
        %1878 = vst.msk [vmem:[%s461] sm:$0xff] %vm488, %v1877
        %s1879 = sand.u32 %s232, 1
        %s1880 = scalar_lea.sflag [#allocation4], %s1879
        %s1881 = sand.u32 %s232, 1
        %s1882 = smul.addr %s1881, 8
        %s1883 = scalar_lea.vmem [#allocation17], %s1882
        // Predicated region
        $region93: #{tpu_custom_call.1} parent=55 // pred_check
          %p1884 = pneg %p242
        $region94: #{tpu_custom_call.1} parent=55 // pred_check_branch
          %1886 = sbr.rel (%p1884) target = $region96
        $region95: #{tpu_custom_call.1} parent=55 // pred_region
          %s1888 = ssub.s32 128, 128
          %1889 = vsyncadd %s1880, %s1888
          %s1890 = smul.addr %s30, 128
          %s1891 = scalar_lea.hbm %s9, %s1890
          %s1893 = sshll.u32 %s1883, 4
          %s1894 = int_to_ptr.vmem [resolvable:$true] %s1893
          %1896 = dma.vmem_to_hbm [thread:$0]  %s1894, 128, %s1891, %s1880
        $region96: #{tpu_custom_call.1} parent=55 // pred_fallthru
          _
      $region56: #{tpu_custom_call.1} parent=5 // pred_fallthru
        _
      %p1897 = scmp.le.s32.totalorder 2, %s25
      // Predicated region
      $region97: #{tpu_custom_call.1} parent=5 // pred_check
        %p1898 = pneg %p1897
      $region98: #{tpu_custom_call.1} parent=5 // pred_check_branch
        %1900 = sbr.rel (%p1898) target = $region100
      $region99: #{tpu_custom_call.1} parent=5 // pred_region
        %s1901 = ssub.s32 %s25, 2
        // Predicated region
        $region101: #{tpu_custom_call.1} parent=99 // pred_check
          %p1902 = pneg %p248
        $region102: #{tpu_custom_call.1} parent=99 // pred_check_branch
          %1904 = sbr.rel (%p1902) target = $region104
        $region103: #{tpu_custom_call.1} parent=99 // pred_region
          %s1905 = sand.u32 %s233, 1
          %s1906 = scalar_lea.sflag [#allocation4], %s1905
          %s1907 = sand.u32 %s233, 1
          %s1908 = smul.addr %s1907, 8
          %s1909 = scalar_lea.vmem [#allocation17], %s1908
          %1910 = dma.done %s1906, 128
        $region104: #{tpu_custom_call.1} parent=99 // pred_fallthru
          _
      $region100: #{tpu_custom_call.1} parent=5 // pred_fallthru
        _
    $region6: #{tpu_custom_call.1} parent=1 // loop_footer
      %s29 = sadd.s32 1, %s25
    $region7: #{tpu_custom_call.1} parent=1 // loop_footer_branch
      %24 = sbr.rel target = $region3
    $region8: #{tpu_custom_call.1} parent=1 // loop_exit
      _
    %1911 = vsyncpa [#allocation3], 1
    %s1912 = scalar_lea.sflag [#allocation3], 1
    %1913 = vsyncpa %s1912, 1
    %1914 = vsyncpa [#allocation6], 1
    %1915 = vsyncpa [#allocation9], 1
    %1916 = vsyncpa [#allocation12], 1
    %1917 = vsyncpa [#allocation15], 1
    %1918 = vsyncpa [#allocation4], 1
    %s1919 = scalar_lea.sflag [#allocation4], 1
    %1920 = vsyncpa %s1919, 1

</llo_original>
